<compile_context>
chip_gen: v6e
topology: v6e:2x2x1
jax: 0.10.0
libtpu: 0.0.40
codegen_flags: <defaults>
</compile_context>

<pallas_src>
import jax
import jax.numpy as jnp
from jax import lax
from jax.experimental import pallas as pl
from jax.experimental.pallas import tpu as pltpu

_SUBLANE = 8
_LANE = 128


def _round_up(x, m):
    return (x + m - 1) // m * m


def _pick_tile(dim, target, quantum):
    """Largest multiple of `quantum` <= target that divides `dim` (dim % quantum == 0)."""
    if dim <= target:
        return dim
    t = (target // quantum) * quantum
    while dim % t:
        t -= quantum
    return t


def _pick_chunk(T):
    """Chunk length (must divide T) for the look-ahead input-side matmul."""
    for cand in (16, 12, 8, 6, 4, 3, 2):
        if cand < T and T % cand == 0:
            return cand
    return T


# --------------------------------------------------------------------------
# Kernel 1: GRU recurrence (embedding inputs -> per-step hidden states)
# --------------------------------------------------------------------------
def _make_recurrence_kernel(T, Tc, Bp, Ep, Hp):
    num_chunks = T // Tc
    inner_unroll = min(Tc, 4)   # bounded unroll (review: avoid full unroll at big T)

    def kernel(x_hbm, h0_ref, wih_ref, whh_ref, bgi_ref, bhn_ref,
               hs_hbm, hfin_ref, x_vmem, gi_ref, hs_vmem):
        # Single-buffered staging of the whole-array embedded inputs:
        # memory_space=ANY + one explicit DMA instead of a (default
        # double-buffered) BlockSpec copy.  With grid=(1,) there is nothing to
        # pipeline, so this halves the VMEM footprint of the big operand.
        pltpu.sync_copy(x_hbm, x_vmem)

        wih = wih_ref[...]          # (Ep, 3Hp) bf16
        whh = whh_ref[...]          # (Hp, 3Hp) bf16
        bgi = bgi_ref[...]          # (1, 3Hp) f32  = b_ih (+ b_hh for r/z gates)
        bhn = bhn_ref[...]          # (1, Hp)  f32  = n-gate b_hh (stays in the loop)

        def gi_chunk(c):
            # Hoisted input-side matmul for steps [c*Tc, (c+1)*Tc):
            # bf16 operands, f32 accumulation, folded bias fused in.
            t0 = pl.multiple_of(c * Tc, Tc)
            xc = x_vmem[pl.ds(t0, Tc)].reshape(Tc * Bp, Ep).astype(jnp.bfloat16)
            gi = jnp.dot(xc, wih, preferred_element_type=jnp.float32) + bgi
            gi_ref[pl.ds(t0, Tc)] = gi.reshape(Tc, Bp, 3 * Hp)

        # Chunk 0 must be ready before the first step.
        gi_chunk(0)

        def chunk_body(c, h):
            # Look-ahead: the GI matmul for chunk c+1 does not depend on the
            # serial recurrence over chunk c, so its MXU work can be
            # interleaved with the latency-bound per-step matmul/EUP chain.
            @pl.when(c + 1 < num_chunks)
            def _():
                gi_chunk(c + 1)

            def step(tt, h_prev):
                t = c * Tc + tt
                gi = gi_ref[t]                                         # (Bp, 3Hp) f32
                gh = jnp.dot(h_prev.astype(jnp.bfloat16), whh,
                             preferred_element_type=jnp.float32)       # (Bp, 3Hp) f32

                # Gate blocks sit at lane-aligned offsets (multiples of Hp);
                # PyTorch nn.GRU gate order: [r, z, n].  Gate math stays f32.
                i_r, i_z, i_n = gi[:, :Hp], gi[:, Hp:2 * Hp], gi[:, 2 * Hp:]
                h_r, h_z, h_n = gh[:, :Hp], gh[:, Hp:2 * Hp], gh[:, 2 * Hp:]

                r = jax.nn.sigmoid(i_r + h_r)
                z = jax.nn.sigmoid(i_z + h_z)
                n = jnp.tanh(i_n + r * (h_n + bhn))
                h_new = (1.0 - z) * n + z * h_prev                     # f32 carry

                hs_vmem[t] = h_new                                     # stage h_t
                return h_new

            return lax.fori_loop(0, Tc, step, h, unroll=inner_unroll)

        h_last = lax.fori_loop(0, num_chunks, chunk_body, h0_ref[...])

        # Final hidden state: written exactly once, full f32 fidelity.
        hfin_ref[...] = h_last

        # One bulk writeback DMA of all staged h_t for the projection kernel.
        pltpu.sync_copy(hs_vmem, hs_hbm)

    return kernel


# --------------------------------------------------------------------------
# Kernel 2: output projection  logits = hs @ W_out^T + b_out  (tiled matmul)
# --------------------------------------------------------------------------
def _proj_kernel(hs_ref, w_ref, b_ref, o_ref, acc_ref):
    @pl.when(pl.program_id(2) == 0)
    def _():
        acc_ref[...] = jnp.zeros_like(acc_ref)

    acc_ref[...] += jnp.dot(hs_ref[...].astype(jnp.bfloat16), w_ref[...],
                            preferred_element_type=jnp.float32)

    @pl.when(pl.program_id(2) == pl.num_programs(2) - 1)
    def _():
        o_ref[...] = (acc_ref[...] + b_ref[...]).astype(o_ref.dtype)


# --------------------------------------------------------------------------
# Parameter padding helpers (PyTorch layout -> lane-aligned, gate-padded)
# --------------------------------------------------------------------------
def _pad_gate_weight_t(w, in_dim, in_pad, H, Hp, dtype):
    """w: (3H, in_dim) torch gate-stacked [r,z,n] -> (in_pad, 3*Hp) transposed,
    each gate block placed at a lane-aligned offset g*Hp."""
    out = jnp.zeros((in_pad, 3 * Hp), dtype)
    for g in range(3):
        blk = jnp.transpose(w[g * H:(g + 1) * H, :]).astype(dtype)   # (in_dim, H)
        out = out.at[:in_dim, g * Hp:g * Hp + H].set(blk)
    return out


def _pad_gate_bias(b, H, Hp):
    out = jnp.zeros((1, 3 * Hp), jnp.float32)
    for g in range(3):
        out = out.at[0, g * Hp:g * Hp + H].set(b[g * H:(g + 1) * H].astype(jnp.float32))
    return out


# --------------------------------------------------------------------------
# Public forward (matches DecoderRNN.forward semantics)
# --------------------------------------------------------------------------
def decoder_rnn_forward(tokens, hidden, params):
    """tokens: (T, B) int32; hidden: (1, B, H) f32 -> (logits (T,B,V), hidden (1,B,H))."""
    emb_table = params["embedding"]                  # (V, E)
    w_ih, w_hh = params["w_ih"], params["w_hh"]      # (3H, E), (3H, H) torch layout
    b_ih, b_hh = params["b_ih"], params["b_hh"]      # (3H,), (3H,)
    w_out, b_out = params["w_out"], params["b_out"]  # (V, H), (V,)

    T, B = tokens.shape
    V, E = emb_table.shape
    H = w_hh.shape[1]

    Bp = _round_up(B, _SUBLANE)      # sublane tile
    Ep = _round_up(E, _LANE)         # lane tiles
    Hp = _round_up(H, _LANE)
    Vp = _round_up(V, _LANE)
    Tc = _pick_chunk(T)              # GI look-ahead chunk length (divides T)
    M = T * Bp                       # flattened (time x padded-batch) rows

    f32b, bf16b = 4, 2

    # --- glue: embedding gather straight into the padded layout.  Padding
    # tokens with id 0 only affects padded batch rows, which are independent
    # through the GRU and sliced away at the end.
    # TODO(synk): fuse the gather in-kernel (scalar-prefetched token ids + DMA of
    # rows of the HBM-resident table) to remove this HBM round-trip entirely.
    tokens_p = jnp.zeros((T, Bp), jnp.int32).at[:, :B].set(tokens.astype(jnp.int32))
    emb_p = jnp.zeros((V, Ep), jnp.float32).at[:, :E].set(emb_table.astype(jnp.float32))
    x = jnp.take(emb_p, tokens_p.reshape(M), axis=0).reshape(T, Bp, Ep)   # (T, Bp, Ep) f32

    h0 = jnp.zeros((Bp, Hp), jnp.float32).at[:B, :H].set(
        hidden.reshape(B, H).astype(jnp.float32))

    # Weights in bf16 (MXU-native on v5e/v6e/v7x); accumulation stays f32.
    wih_t = _pad_gate_weight_t(w_ih, E, Ep, H, Hp, jnp.bfloat16)   # (Ep, 3Hp)
    whh_t = _pad_gate_weight_t(w_hh, H, Hp, H, Hp, jnp.bfloat16)   # (Hp, 3Hp)

    # Bias folding: b_hh for the r/z gates moves into the hoisted GI bias; only
    # the n-gate b_hh stays inside the serial loop (it sits inside r*(h@W_hn+b)).
    b_gi = _pad_gate_bias(b_ih, H, Hp)
    b_gi = b_gi.at[0, :2 * Hp].add(_pad_gate_bias(b_hh, H, Hp)[0, :2 * Hp])
    b_hn = jnp.zeros((1, Hp), jnp.float32).at[0, :H].set(
        b_hh[2 * H:3 * H].astype(jnp.float32))

    wout_t = jnp.zeros((Hp, Vp), jnp.bfloat16).at[:H, :V].set(
        jnp.transpose(w_out).astype(jnp.bfloat16))                  # (Hp, Vp)
    bout = jnp.zeros((1, Vp), jnp.float32).at[0, :V].set(b_out.astype(jnp.float32))

    # ---------------- kernel 1: recurrence ----------------
    rec_kernel = _make_recurrence_kernel(T, Tc, Bp, Ep, Hp)

    rec_vmem = (
        M * Ep * f32b                                   # x staging (single-buffered)
        + M * 3 * Hp * f32b                             # GI scratch
        + M * Hp * f32b                                 # staged hidden states
        + 2 * (Ep * 3 * Hp + Hp * 3 * Hp) * bf16b       # gate weights (2 pipeline bufs)
        + 2 * (4 * Hp + 2 * Bp * Hp) * f32b             # biases, h0, h_final
    )

    hs, h_final = pl.pallas_call(
        rec_kernel,
        out_shape=(
            jax.ShapeDtypeStruct((T, Bp, Hp), jnp.float32),   # staged hidden states
            jax.ShapeDtypeStruct((Bp, Hp), jnp.float32),      # final hidden state
        ),
        grid_spec=pltpu.PrefetchScalarGridSpec(
            num_scalar_prefetch=0,
            grid=(1,),                                        # whole recurrence in-kernel
            in_specs=[
                pl.BlockSpec(memory_space=pl.ANY),            # x (HBM, one DMA)
                pl.BlockSpec((Bp, Hp), lambda i: (0, 0)),     # h0
                pl.BlockSpec((Ep, 3 * Hp), lambda i: (0, 0)),  # W_ih^T (gate-padded)
                pl.BlockSpec((Hp, 3 * Hp), lambda i: (0, 0)),  # W_hh^T (gate-padded)
                pl.BlockSpec((1, 3 * Hp), lambda i: (0, 0)),   # folded GI bias
                pl.BlockSpec((1, Hp), lambda i: (0, 0)),       # n-gate hidden bias
            ],
            out_specs=[
                pl.BlockSpec(memory_space=pl.ANY),            # hs (HBM, one DMA)
                pl.BlockSpec((Bp, Hp), lambda i: (0, 0)),     # final hidden
            ],
            scratch_shapes=[
                pltpu.VMEM((T, Bp, Ep), jnp.float32),         # x staging
                pltpu.VMEM((T, Bp, 3 * Hp), jnp.float32),     # GI for all steps
                pltpu.VMEM((T, Bp, Hp), jnp.float32),         # staged h_t
            ],
        ),
        compiler_params=pltpu.CompilerParams(
            dimension_semantics=("arbitrary",),
            vmem_limit_bytes=rec_vmem + (8 << 20),
        ),
    )(x, h0, wih_t, whh_t, b_gi, b_hn)

    # ---------------- kernel 2: tiled output projection ----------------
    # Tile caps chosen so per-buffer footprint stays small even on v7x (64 MiB).
    tm = _pick_tile(M, 256, _SUBLANE)
    tn = _pick_tile(Vp, 1024, _LANE)
    tk = _pick_tile(Hp, 512, _LANE)

    proj_vmem = (2 * (tm * tk * f32b + tk * tn * bf16b + tn * f32b + tm * tn * f32b)
                 + tm * tn * f32b)

    hs_flat = hs.reshape(M, Hp)   # metadata-only reshape

    logits_flat = pl.pallas_call(
        _proj_kernel,
        out_shape=jax.ShapeDtypeStruct((M, Vp), jnp.float32),
        grid_spec=pltpu.PrefetchScalarGridSpec(
            num_scalar_prefetch=0,
            grid=(M // tm, Vp // tn, Hp // tk),
            in_specs=[
                pl.BlockSpec((tm, tk), lambda i, j, k: (i, k)),   # hidden states
                pl.BlockSpec((tk, tn), lambda i, j, k: (k, j)),   # W_out^T (streamed)
                pl.BlockSpec((1, tn), lambda i, j, k: (0, j)),    # b_out
            ],
            out_specs=pl.BlockSpec((tm, tn), lambda i, j, k: (i, j)),
            scratch_shapes=[pltpu.VMEM((tm, tn), jnp.float32)],
        ),
        compiler_params=pltpu.CompilerParams(
            dimension_semantics=("parallel", "parallel", "arbitrary"),
            vmem_limit_bytes=proj_vmem + (4 << 20),
        ),
    )(hs_flat, wout_t, bout)

    logits = logits_flat.reshape(T, Bp, Vp)[:, :B, :V]
    h_out = h_final[:B, :H].reshape(1, B, H)
    return logits, h_out


# --------------------------------------------------------------------------
# Pure-JAX reference of the PyTorch DecoderRNN.forward semantics
# --------------------------------------------------------------------------
def _reference_forward(tokens, hidden, params):
    emb = jnp.take(params["embedding"], tokens, axis=0)  # (T, B, E)
    H = params["w_hh"].shape[1]
    w_ih, w_hh = params["w_ih"], params["w_hh"]
    b_ih, b_hh = params["b_ih"], params["b_hh"]

    def step(h, x_t):
        gi = x_t @ w_ih.T + b_ih
        gh = h @ w_hh.T + b_hh
        r = jax.nn.sigmoid(gi[:, :H] + gh[:, :H])
        z = jax.nn.sigmoid(gi[:, H:2 * H] + gh[:, H:2 * H])
        n = jnp.tanh(gi[:, 2 * H:] + r * gh[:, 2 * H:])
        h_new = (1.0 - z) * n + z * h
        return h_new, h_new

    h_last, outs = jax.lax.scan(step, hidden[0], emb)
    logits = outs @ params["w_out"].T + params["b_out"]
    return logits, h_last[None]


if __name__ == "__main__":
    # Small shapes consistent with the module.
    T, B = 8, 4            # sequence length, batch
    V = 16                 # output_size (vocab)
    E = 32                 # embedding_size
    H = 32                 # hidden_size

    key = jax.random.PRNGKey(0)
    ks = jax.random.split(key, 9)

    params = {
        "embedding": jax.random.normal(ks[0], (V, E), jnp.float32) * 0.1,
        "w_ih": jax.random.normal(ks[1], (3 * H, E), jnp.float32) * 0.1,
        "w_hh": jax.random.normal(ks[2], (3 * H, H), jnp.float32) * 0.1,
        "b_ih": jax.random.normal(ks[3], (3 * H,), jnp.float32) * 0.1,
        "b_hh": jax.random.normal(ks[4], (3 * H,), jnp.float32) * 0.1,
        "w_out": jax.random.normal(ks[5], (V, H), jnp.float32) * 0.1,
        "b_out": jax.random.normal(ks[6], (V,), jnp.float32) * 0.1,
    }

    tokens = jax.random.randint(ks[7], (T, B), 0, V, dtype=jnp.int32)
    hidden0 = jax.random.normal(ks[8], (1, B, H), jnp.float32)

    logits, h_out = decoder_rnn_forward(tokens, hidden0, params)
    logits = jax.block_until_ready(logits)
    h_out = jax.block_until_ready(h_out)

    ref_logits, ref_h = _reference_forward(tokens, hidden0, params)
    assert logits.shape == (T, B, V) and h_out.shape == (1, B, H)
    # bf16 MXU operands (f32 accumulation) -> tolerance loosened vs pure-f32.
    assert jnp.allclose(logits, ref_logits, atol=5e-2, rtol=5e-2), (
        "logits max abs err = %f" % float(jnp.max(jnp.abs(logits - ref_logits))))
    assert jnp.allclose(h_out, ref_h, atol=5e-2, rtol=5e-2), (
        "hidden max abs err = %f" % float(jnp.max(jnp.abs(h_out - ref_h))))

    print("KERNEL_OK")
</pallas_src>

<mosaic_0001>
module attributes {stable_mosaic.version = 11 : i64} {
  func.func @kernel(%arg0: i32, %arg1: memref<8x8x128xf32, #tpu.memory_space<any>>, %arg2: memref<8x128xf32, #tpu.memory_space<vmem>>, %arg3: memref<128x384xbf16, #tpu.memory_space<vmem>>, %arg4: memref<128x384xbf16, #tpu.memory_space<vmem>>, %arg5: memref<1x384xf32, #tpu.memory_space<vmem>>, %arg6: memref<1x128xf32, #tpu.memory_space<vmem>>, %arg7: memref<8x8x128xf32, #tpu.memory_space<any>>, %arg8: memref<8x128xf32, #tpu.memory_space<vmem>>, %arg9: memref<8x8x128xf32, #tpu.memory_space<vmem>>, %arg10: memref<8x8x384xf32, #tpu.memory_space<vmem>>, %arg11: memref<8x8x128xf32, #tpu.memory_space<vmem>>) attributes {dimension_semantics = [#tpu.dimension_semantics<arbitrary>], iteration_bounds = array<i64: 1>, scalar_prefetch = 0 : i64, scratch_operands = 3 : i64, tpu.core_type = #tpu.core_type<tc>, window_params = [{}, {pipeline_mode = #tpu.pipeline_mode<synchronous>, transform_indices = @transform_1, window_bounds = array<i64: 8, 128>}, {pipeline_mode = #tpu.pipeline_mode<synchronous>, transform_indices = @transform_2, window_bounds = array<i64: 128, 384>}, {pipeline_mode = #tpu.pipeline_mode<synchronous>, transform_indices = @transform_3, window_bounds = array<i64: 128, 384>}, {pipeline_mode = #tpu.pipeline_mode<synchronous>, transform_indices = @transform_4, window_bounds = array<i64: 1, 384>}, {pipeline_mode = #tpu.pipeline_mode<synchronous>, transform_indices = @transform_5, window_bounds = array<i64: 1, 128>}, {}, {pipeline_mode = #tpu.pipeline_mode<synchronous>, transform_indices = @transform_7, window_bounds = array<i64: 8, 128>}]} {
    "tpu.region"() ({
      %19 = tpu.sem_alloc : memref<!tpu.dma_semaphore, #tpu.memory_space<semaphore_mem>>
      tpu.enqueue_dma source(%arg1 : memref<8x8x128xf32, #tpu.memory_space<any>>) target(%arg9 : memref<8x8x128xf32, #tpu.memory_space<vmem>>) target_semaphore(%19 : memref<!tpu.dma_semaphore, #tpu.memory_space<semaphore_mem>>)
      tpu.wait_dma2 semaphore(%19 : memref<!tpu.dma_semaphore, #tpu.memory_space<semaphore_mem>>) src(%arg1 : memref<8x8x128xf32, #tpu.memory_space<any>>) dst(%arg9 : memref<8x8x128xf32, #tpu.memory_space<vmem>>)
      tpu.yield
    }) : () -> ()
    %c0 = arith.constant 0 : index
    %c0_0 = arith.constant 0 : index
    %0 = vector.load %arg3[%c0, %c0_0] : memref<128x384xbf16, #tpu.memory_space<vmem>>, vector<128x384xbf16>
    %c0_1 = arith.constant 0 : index
    %c0_2 = arith.constant 0 : index
    %1 = vector.load %arg4[%c0_1, %c0_2] : memref<128x384xbf16, #tpu.memory_space<vmem>>, vector<128x384xbf16>
    %c0_3 = arith.constant 0 : index
    %c0_4 = arith.constant 0 : index
    %2 = vector.load %arg5[%c0_3, %c0_4] : memref<1x384xf32, #tpu.memory_space<vmem>>, vector<1x384xf32>
    %c0_5 = arith.constant 0 : index
    %c0_6 = arith.constant 0 : index
    %3 = vector.load %arg6[%c0_5, %c0_6] : memref<1x128xf32, #tpu.memory_space<vmem>>, vector<1x128xf32>
    %c0_i32 = arith.constant 0 : i32
    %4 = tpu.assume_multiple %c0_i32, 4 : i32
    %5 = arith.index_cast %4 : i32 to index
    %c0_7 = arith.constant 0 : index
    %c0_8 = arith.constant 0 : index
    %6 = vector.load %arg9[%5, %c0_7, %c0_8] : memref<8x8x128xf32, #tpu.memory_space<vmem>>, vector<4x8x128xf32>
    %7 = vector.shape_cast %6 : vector<4x8x128xf32> to vector<32x128xf32>
    %8 = arith.truncf %7 : vector<32x128xf32> to vector<32x128xbf16>
    %cst = arith.constant dense<0.000000e+00> : vector<32x384xf32>
    %9 = tpu.matmul %8, %0, %cst {dimension_numbers = #tpu.dot_dimension_numbers<[1], [0], [0], [1], [0, 0, 1, 1], [], []>} : vector<32x128xbf16>, vector<128x384xbf16>, vector<32x384xf32> -> vector<32x384xf32>
    %10 = vector.broadcast %2 : vector<1x384xf32> to vector<32x384xf32>
    %11 = arith.addf %9, %10 : vector<32x384xf32>
    %12 = vector.shape_cast %11 : vector<32x384xf32> to vector<4x8x384xf32>
    %13 = arith.index_cast %4 : i32 to index
    %c0_9 = arith.constant 0 : index
    %c0_10 = arith.constant 0 : index
    %14 = vector.load %arg10[%13, %c0_9, %c0_10] : memref<8x8x384xf32, #tpu.memory_space<vmem>>, vector<4x8x384xf32>
    tpu.vector_store %arg10[%13, %c0_9, %c0_10], %12 {strides = array<i32>} : memref<8x8x384xf32, #tpu.memory_space<vmem>>, vector<4x8x384xf32>,
    %c0_11 = arith.constant 0 : index
    %c0_12 = arith.constant 0 : index
    %15 = vector.load %arg2[%c0_11, %c0_12] : memref<8x128xf32, #tpu.memory_space<vmem>>, vector<8x128xf32>
    %c0_i32_13 = arith.constant 0 : i32
    %c2_i32 = arith.constant 2 : i32
    %16 = arith.addi %c0_i32_13, %c2_i32 : i32
    %c1_i32 = arith.constant 1 : i32
    %17 = scf.for %arg12 = %c0_i32_13 to %16 step %c1_i32 iter_args(%arg13 = %15) -> (vector<8x128xf32>)  : i32 {
      %c1_i32_17 = arith.constant 1 : i32
      %19 = arith.addi %arg12, %c1_i32_17 : i32
      %c2_i32_18 = arith.constant 2 : i32
      %20 = arith.cmpi slt, %19, %c2_i32_18 : i32
      %21 = arith.extui %20 : i1 to i32
      %c0_i32_19 = arith.constant 0 : i32
      %22 = arith.cmpi ne, %21, %c0_i32_19 : i32
      scf.if %22 {
        %c1_i32_59 = arith.constant 1 : i32
        %179 = arith.addi %arg12, %c1_i32_59 : i32
        %c4_i32_60 = arith.constant 4 : i32
        %180 = arith.muli %179, %c4_i32_60 : i32
        %181 = tpu.assume_multiple %180, 4 : i32
        %182 = arith.index_cast %181 : i32 to index
        %c0_61 = arith.constant 0 : index
        %c0_62 = arith.constant 0 : index
        %183 = vector.load %arg9[%182, %c0_61, %c0_62] : memref<8x8x128xf32, #tpu.memory_space<vmem>>, vector<4x8x128xf32>
        %184 = vector.shape_cast %183 : vector<4x8x128xf32> to vector<32x128xf32>
        %185 = arith.truncf %184 : vector<32x128xf32> to vector<32x128xbf16>
        %cst_63 = arith.constant dense<0.000000e+00> : vector<32x384xf32>
        %186 = tpu.matmul %185, %0, %cst_63 {dimension_numbers = #tpu.dot_dimension_numbers<[1], [0], [0], [1], [0, 0, 1, 1], [], []>} : vector<32x128xbf16>, vector<128x384xbf16>, vector<32x384xf32> -> vector<32x384xf32>
        %187 = vector.broadcast %2 : vector<1x384xf32> to vector<32x384xf32>
        %188 = arith.addf %186, %187 : vector<32x384xf32>
        %189 = vector.shape_cast %188 : vector<32x384xf32> to vector<4x8x384xf32>
        %190 = arith.index_cast %181 : i32 to index
        %c0_64 = arith.constant 0 : index
        %c0_65 = arith.constant 0 : index
        %191 = vector.load %arg10[%190, %c0_64, %c0_65] : memref<8x8x384xf32, #tpu.memory_space<vmem>>, vector<4x8x384xf32>
        tpu.vector_store %arg10[%190, %c0_64, %c0_65], %189 {strides = array<i32>} : memref<8x8x384xf32, #tpu.memory_space<vmem>>, vector<4x8x384xf32>,
      } else {
      }
      %c0_i32_20 = arith.constant 0 : i32
      %c4_i32 = arith.constant 4 : i32
      %23 = arith.muli %arg12, %c4_i32 : i32
      %24 = arith.addi %23, %c0_i32_20 : i32
      %25 = arith.index_cast %24 : i32 to index
      %c0_21 = arith.constant 0 : index
      %c0_22 = arith.constant 0 : index
      %26 = vector.load %arg10[%25, %c0_21, %c0_22] : memref<8x8x384xf32, #tpu.memory_space<vmem>>, vector<1x8x384xf32>
      %27 = vector.shape_cast %26 : vector<1x8x384xf32> to vector<8x384xf32>
      %28 = arith.truncf %arg13 : vector<8x128xf32> to vector<8x128xbf16>
      %cst_23 = arith.constant dense<0.000000e+00> : vector<8x384xf32>
      %29 = tpu.matmul %28, %1, %cst_23 {dimension_numbers = #tpu.dot_dimension_numbers<[1], [0], [0], [1], [0, 0, 1, 1], [], []>} : vector<8x128xbf16>, vector<128x384xbf16>, vector<8x384xf32> -> vector<8x384xf32>
      %30 = vector.extract_strided_slice %27 {offsets = [0, 0], sizes = [8, 128], strides = [1, 1]} : vector<8x384xf32> to vector<8x128xf32>
      %31 = vector.extract_strided_slice %27 {offsets = [0, 128], sizes = [8, 128], strides = [1, 1]} : vector<8x384xf32> to vector<8x128xf32>
      %32 = vector.extract_strided_slice %27 {offsets = [0, 256], sizes = [8, 128], strides = [1, 1]} : vector<8x384xf32> to vector<8x128xf32>
      %33 = vector.extract_strided_slice %29 {offsets = [0, 0], sizes = [8, 128], strides = [1, 1]} : vector<8x384xf32> to vector<8x128xf32>
      %34 = vector.extract_strided_slice %29 {offsets = [0, 128], sizes = [8, 128], strides = [1, 1]} : vector<8x384xf32> to vector<8x128xf32>
      %35 = vector.extract_strided_slice %29 {offsets = [0, 256], sizes = [8, 128], strides = [1, 1]} : vector<8x384xf32> to vector<8x128xf32>
      %36 = arith.addf %30, %33 : vector<8x128xf32>
      %37 = arith.negf %36 : vector<8x128xf32>
      %38 = math.exp %37 : vector<8x128xf32>
      %cst_24 = arith.constant 1.000000e+00 : f32
      %39 = vector.broadcast %cst_24 : f32 to vector<8x128xf32>
      %40 = arith.addf %39, %38 : vector<8x128xf32>
      %41 = arith.divf %39, %40 : vector<8x128xf32>
      %42 = arith.addf %31, %34 : vector<8x128xf32>
      %43 = arith.negf %42 : vector<8x128xf32>
      %44 = math.exp %43 : vector<8x128xf32>
      %cst_25 = arith.constant 1.000000e+00 : f32
      %45 = vector.broadcast %cst_25 : f32 to vector<8x128xf32>
      %46 = arith.addf %45, %44 : vector<8x128xf32>
      %47 = arith.divf %45, %46 : vector<8x128xf32>
      %48 = vector.broadcast %3 : vector<1x128xf32> to vector<8x128xf32>
      %49 = arith.addf %35, %48 : vector<8x128xf32>
      %50 = arith.mulf %41, %49 : vector<8x128xf32>
      %51 = arith.addf %32, %50 : vector<8x128xf32>
      %52 = math.tanh %51 : vector<8x128xf32>
      %cst_26 = arith.constant 1.000000e+00 : f32
      %53 = vector.broadcast %cst_26 : f32 to vector<8x128xf32>
      %54 = arith.subf %53, %47 : vector<8x128xf32>
      %55 = arith.mulf %54, %52 : vector<8x128xf32>
      %56 = arith.mulf %47, %arg13 : vector<8x128xf32>
      %57 = arith.addf %55, %56 : vector<8x128xf32>
      %58 = arith.index_cast %24 : i32 to index
      %c0_27 = arith.constant 0 : index
      %c0_28 = arith.constant 0 : index
      %59 = vector.load %arg11[%58, %c0_27, %c0_28] : memref<8x8x128xf32, #tpu.memory_space<vmem>>, vector<1x8x128xf32>
      %60 = vector.shape_cast %59 : vector<1x8x128xf32> to vector<8x128xf32>
      %61 = vector.shape_cast %57 : vector<8x128xf32> to vector<1x8x128xf32>
      tpu.vector_store %arg11[%58, %c0_27, %c0_28], %61 {strides = array<i32>} : memref<8x8x128xf32, #tpu.memory_space<vmem>>, vector<1x8x128xf32>,
      %c1_i32_29 = arith.constant 1 : i32
      %c4_i32_30 = arith.constant 4 : i32
      %62 = arith.muli %arg12, %c4_i32_30 : i32
      %63 = arith.addi %62, %c1_i32_29 : i32
      %64 = arith.index_cast %63 : i32 to index
      %c0_31 = arith.constant 0 : index
      %c0_32 = arith.constant 0 : index
      %65 = vector.load %arg10[%64, %c0_31, %c0_32] : memref<8x8x384xf32, #tpu.memory_space<vmem>>, vector<1x8x384xf32>
      %66 = vector.shape_cast %65 : vector<1x8x384xf32> to vector<8x384xf32>
      %67 = arith.truncf %57 : vector<8x128xf32> to vector<8x128xbf16>
      %cst_33 = arith.constant dense<0.000000e+00> : vector<8x384xf32>
      %68 = tpu.matmul %67, %1, %cst_33 {dimension_numbers = #tpu.dot_dimension_numbers<[1], [0], [0], [1], [0, 0, 1, 1], [], []>} : vector<8x128xbf16>, vector<128x384xbf16>, vector<8x384xf32> -> vector<8x384xf32>
      %69 = vector.extract_strided_slice %66 {offsets = [0, 0], sizes = [8, 128], strides = [1, 1]} : vector<8x384xf32> to vector<8x128xf32>
      %70 = vector.extract_strided_slice %66 {offsets = [0, 128], sizes = [8, 128], strides = [1, 1]} : vector<8x384xf32> to vector<8x128xf32>
      %71 = vector.extract_strided_slice %66 {offsets = [0, 256], sizes = [8, 128], strides = [1, 1]} : vector<8x384xf32> to vector<8x128xf32>
      %72 = vector.extract_strided_slice %68 {offsets = [0, 0], sizes = [8, 128], strides = [1, 1]} : vector<8x384xf32> to vector<8x128xf32>
      %73 = vector.extract_strided_slice %68 {offsets = [0, 128], sizes = [8, 128], strides = [1, 1]} : vector<8x384xf32> to vector<8x128xf32>
      %74 = vector.extract_strided_slice %68 {offsets = [0, 256], sizes = [8, 128], strides = [1, 1]} : vector<8x384xf32> to vector<8x128xf32>
      %75 = arith.addf %69, %72 : vector<8x128xf32>
      %76 = arith.negf %75 : vector<8x128xf32>
      %77 = math.exp %76 : vector<8x128xf32>
      %cst_34 = arith.constant 1.000000e+00 : f32
      %78 = vector.broadcast %cst_34 : f32 to vector<8x128xf32>
      %79 = arith.addf %78, %77 : vector<8x128xf32>
      %80 = arith.divf %78, %79 : vector<8x128xf32>
      %81 = arith.addf %70, %73 : vector<8x128xf32>
      %82 = arith.negf %81 : vector<8x128xf32>
      %83 = math.exp %82 : vector<8x128xf32>
      %cst_35 = arith.constant 1.000000e+00 : f32
      %84 = vector.broadcast %cst_35 : f32 to vector<8x128xf32>
      %85 = arith.addf %84, %83 : vector<8x128xf32>
      %86 = arith.divf %84, %85 : vector<8x128xf32>
      %87 = vector.broadcast %3 : vector<1x128xf32> to vector<8x128xf32>
      %88 = arith.addf %74, %87 : vector<8x128xf32>
      %89 = arith.mulf %80, %88 : vector<8x128xf32>
      %90 = arith.addf %71, %89 : vector<8x128xf32>
      %91 = math.tanh %90 : vector<8x128xf32>
      %cst_36 = arith.constant 1.000000e+00 : f32
      %92 = vector.broadcast %cst_36 : f32 to vector<8x128xf32>
      %93 = arith.subf %92, %86 : vector<8x128xf32>
      %94 = arith.mulf %93, %91 : vector<8x128xf32>
      %95 = arith.mulf %86, %57 : vector<8x128xf32>
      %96 = arith.addf %94, %95 : vector<8x128xf32>
      %97 = arith.index_cast %63 : i32 to index
      %c0_37 = arith.constant 0 : index
      %c0_38 = arith.constant 0 : index
      %98 = vector.load %arg11[%97, %c0_37, %c0_38] : memref<8x8x128xf32, #tpu.memory_space<vmem>>, vector<1x8x128xf32>
      %99 = vector.shape_cast %98 : vector<1x8x128xf32> to vector<8x128xf32>
      %100 = vector.shape_cast %96 : vector<8x128xf32> to vector<1x8x128xf32>
      tpu.vector_store %arg11[%97, %c0_37, %c0_38], %100 {strides = array<i32>} : memref<8x8x128xf32, #tpu.memory_space<vmem>>, vector<1x8x128xf32>,
      %c2_i32_39 = arith.constant 2 : i32
      %c4_i32_40 = arith.constant 4 : i32
      %101 = arith.muli %arg12, %c4_i32_40 : i32
      %102 = arith.addi %101, %c2_i32_39 : i32
      %103 = arith.index_cast %102 : i32 to index
      %c0_41 = arith.constant 0 : index
      %c0_42 = arith.constant 0 : index
      %104 = vector.load %arg10[%103, %c0_41, %c0_42] : memref<8x8x384xf32, #tpu.memory_space<vmem>>, vector<1x8x384xf32>
      %105 = vector.shape_cast %104 : vector<1x8x384xf32> to vector<8x384xf32>
      %106 = arith.truncf %96 : vector<8x128xf32> to vector<8x128xbf16>
      %cst_43 = arith.constant dense<0.000000e+00> : vector<8x384xf32>
      %107 = tpu.matmul %106, %1, %cst_43 {dimension_numbers = #tpu.dot_dimension_numbers<[1], [0], [0], [1], [0, 0, 1, 1], [], []>} : vector<8x128xbf16>, vector<128x384xbf16>, vector<8x384xf32> -> vector<8x384xf32>
      %108 = vector.extract_strided_slice %105 {offsets = [0, 0], sizes = [8, 128], strides = [1, 1]} : vector<8x384xf32> to vector<8x128xf32>
      %109 = vector.extract_strided_slice %105 {offsets = [0, 128], sizes = [8, 128], strides = [1, 1]} : vector<8x384xf32> to vector<8x128xf32>
      %110 = vector.extract_strided_slice %105 {offsets = [0, 256], sizes = [8, 128], strides = [1, 1]} : vector<8x384xf32> to vector<8x128xf32>
      %111 = vector.extract_strided_slice %107 {offsets = [0, 0], sizes = [8, 128], strides = [1, 1]} : vector<8x384xf32> to vector<8x128xf32>
      %112 = vector.extract_strided_slice %107 {offsets = [0, 128], sizes = [8, 128], strides = [1, 1]} : vector<8x384xf32> to vector<8x128xf32>
      %113 = vector.extract_strided_slice %107 {offsets = [0, 256], sizes = [8, 128], strides = [1, 1]} : vector<8x384xf32> to vector<8x128xf32>
      %114 = arith.addf %108, %111 : vector<8x128xf32>
      %115 = arith.negf %114 : vector<8x128xf32>
      %116 = math.exp %115 : vector<8x128xf32>
      %cst_44 = arith.constant 1.000000e+00 : f32
      %117 = vector.broadcast %cst_44 : f32 to vector<8x128xf32>
      %118 = arith.addf %117, %116 : vector<8x128xf32>
      %119 = arith.divf %117, %118 : vector<8x128xf32>
      %120 = arith.addf %109, %112 : vector<8x128xf32>
      %121 = arith.negf %120 : vector<8x128xf32>
      %122 = math.exp %121 : vector<8x128xf32>
      %cst_45 = arith.constant 1.000000e+00 : f32
      %123 = vector.broadcast %cst_45 : f32 to vector<8x128xf32>
      %124 = arith.addf %123, %122 : vector<8x128xf32>
      %125 = arith.divf %123, %124 : vector<8x128xf32>
      %126 = vector.broadcast %3 : vector<1x128xf32> to vector<8x128xf32>
      %127 = arith.addf %113, %126 : vector<8x128xf32>
      %128 = arith.mulf %119, %127 : vector<8x128xf32>
      %129 = arith.addf %110, %128 : vector<8x128xf32>
      %130 = math.tanh %129 : vector<8x128xf32>
      %cst_46 = arith.constant 1.000000e+00 : f32
      %131 = vector.broadcast %cst_46 : f32 to vector<8x128xf32>
      %132 = arith.subf %131, %125 : vector<8x128xf32>
      %133 = arith.mulf %132, %130 : vector<8x128xf32>
      %134 = arith.mulf %125, %96 : vector<8x128xf32>
      %135 = arith.addf %133, %134 : vector<8x128xf32>
      %136 = arith.index_cast %102 : i32 to index
      %c0_47 = arith.constant 0 : index
      %c0_48 = arith.constant 0 : index
      %137 = vector.load %arg11[%136, %c0_47, %c0_48] : memref<8x8x128xf32, #tpu.memory_space<vmem>>, vector<1x8x128xf32>
      %138 = vector.shape_cast %137 : vector<1x8x128xf32> to vector<8x128xf32>
      %139 = vector.shape_cast %135 : vector<8x128xf32> to vector<1x8x128xf32>
      tpu.vector_store %arg11[%136, %c0_47, %c0_48], %139 {strides = array<i32>} : memref<8x8x128xf32, #tpu.memory_space<vmem>>, vector<1x8x128xf32>,
      %c3_i32 = arith.constant 3 : i32
      %c4_i32_49 = arith.constant 4 : i32
      %140 = arith.muli %arg12, %c4_i32_49 : i32
      %141 = arith.addi %140, %c3_i32 : i32
      %142 = arith.index_cast %141 : i32 to index
      %c0_50 = arith.constant 0 : index
      %c0_51 = arith.constant 0 : index
      %143 = vector.load %arg10[%142, %c0_50, %c0_51] : memref<8x8x384xf32, #tpu.memory_space<vmem>>, vector<1x8x384xf32>
      %144 = vector.shape_cast %143 : vector<1x8x384xf32> to vector<8x384xf32>
      %145 = arith.truncf %135 : vector<8x128xf32> to vector<8x128xbf16>
      %cst_52 = arith.constant dense<0.000000e+00> : vector<8x384xf32>
      %146 = tpu.matmul %145, %1, %cst_52 {dimension_numbers = #tpu.dot_dimension_numbers<[1], [0], [0], [1], [0, 0, 1, 1], [], []>} : vector<8x128xbf16>, vector<128x384xbf16>, vector<8x384xf32> -> vector<8x384xf32>
      %147 = vector.extract_strided_slice %144 {offsets = [0, 0], sizes = [8, 128], strides = [1, 1]} : vector<8x384xf32> to vector<8x128xf32>
      %148 = vector.extract_strided_slice %144 {offsets = [0, 128], sizes = [8, 128], strides = [1, 1]} : vector<8x384xf32> to vector<8x128xf32>
      %149 = vector.extract_strided_slice %144 {offsets = [0, 256], sizes = [8, 128], strides = [1, 1]} : vector<8x384xf32> to vector<8x128xf32>
      %150 = vector.extract_strided_slice %146 {offsets = [0, 0], sizes = [8, 128], strides = [1, 1]} : vector<8x384xf32> to vector<8x128xf32>
      %151 = vector.extract_strided_slice %146 {offsets = [0, 128], sizes = [8, 128], strides = [1, 1]} : vector<8x384xf32> to vector<8x128xf32>
      %152 = vector.extract_strided_slice %146 {offsets = [0, 256], sizes = [8, 128], strides = [1, 1]} : vector<8x384xf32> to vector<8x128xf32>
      %153 = arith.addf %147, %150 : vector<8x128xf32>
      %154 = arith.negf %153 : vector<8x128xf32>
      %155 = math.exp %154 : vector<8x128xf32>
      %cst_53 = arith.constant 1.000000e+00 : f32
      %156 = vector.broadcast %cst_53 : f32 to vector<8x128xf32>
      %157 = arith.addf %156, %155 : vector<8x128xf32>
      %158 = arith.divf %156, %157 : vector<8x128xf32>
      %159 = arith.addf %148, %151 : vector<8x128xf32>
      %160 = arith.negf %159 : vector<8x128xf32>
      %161 = math.exp %160 : vector<8x128xf32>
      %cst_54 = arith.constant 1.000000e+00 : f32
      %162 = vector.broadcast %cst_54 : f32 to vector<8x128xf32>
      %163 = arith.addf %162, %161 : vector<8x128xf32>
      %164 = arith.divf %162, %163 : vector<8x128xf32>
      %165 = vector.broadcast %3 : vector<1x128xf32> to vector<8x128xf32>
      %166 = arith.addf %152, %165 : vector<8x128xf32>
      %167 = arith.mulf %158, %166 : vector<8x128xf32>
      %168 = arith.addf %149, %167 : vector<8x128xf32>
      %169 = math.tanh %168 : vector<8x128xf32>
      %cst_55 = arith.constant 1.000000e+00 : f32
      %170 = vector.broadcast %cst_55 : f32 to vector<8x128xf32>
      %171 = arith.subf %170, %164 : vector<8x128xf32>
      %172 = arith.mulf %171, %169 : vector<8x128xf32>
      %173 = arith.mulf %164, %135 : vector<8x128xf32>
      %174 = arith.addf %172, %173 : vector<8x128xf32>
      %175 = arith.index_cast %141 : i32 to index
      %c0_56 = arith.constant 0 : index
      %c0_57 = arith.constant 0 : index
      %176 = vector.load %arg11[%175, %c0_56, %c0_57] : memref<8x8x128xf32, #tpu.memory_space<vmem>>, vector<1x8x128xf32>
      %177 = vector.shape_cast %176 : vector<1x8x128xf32> to vector<8x128xf32>
      %178 = vector.shape_cast %174 : vector<8x128xf32> to vector<1x8x128xf32>
      tpu.vector_store %arg11[%175, %c0_56, %c0_57], %178 {strides = array<i32>} : memref<8x8x128xf32, #tpu.memory_space<vmem>>, vector<1x8x128xf32>,
      %c4_i32_58 = arith.constant 4 : i32
      scf.yield %174 : vector<8x128xf32>
    }
    %c2_i32_14 = arith.constant 2 : i32
    %c0_15 = arith.constant 0 : index
    %c0_16 = arith.constant 0 : index
    %18 = vector.load %arg8[%c0_15, %c0_16] : memref<8x128xf32, #tpu.memory_space<vmem>>, vector<8x128xf32>
    tpu.vector_store %arg8[%c0_15, %c0_16], %17 {strides = array<i32>} : memref<8x128xf32, #tpu.memory_space<vmem>>, vector<8x128xf32>,
    "tpu.region"() ({
      %19 = tpu.sem_alloc : memref<!tpu.dma_semaphore, #tpu.memory_space<semaphore_mem>>
      tpu.enqueue_dma source(%arg11 : memref<8x8x128xf32, #tpu.memory_space<vmem>>) target(%arg7 : memref<8x8x128xf32, #tpu.memory_space<any>>) target_semaphore(%19 : memref<!tpu.dma_semaphore, #tpu.memory_space<semaphore_mem>>)
      tpu.wait_dma2 semaphore(%19 : memref<!tpu.dma_semaphore, #tpu.memory_space<semaphore_mem>>) src(%arg11 : memref<8x8x128xf32, #tpu.memory_space<vmem>>) dst(%arg7 : memref<8x8x128xf32, #tpu.memory_space<any>>)
      tpu.yield
    }) : () -> ()
    return
  }
  func.func @transform_1(%arg0: i32) -> (i32, i32) {
    %c0_i32 = arith.constant 0 : i32
    %c0_i32_0 = arith.constant 0 : i32
    %c0_i32_1 = arith.constant 0 : i32
    return %c0_i32, %c0_i32_0 : i32, i32
  }
  func.func @transform_2(%arg0: i32) -> (i32, i32) {
    %c0_i32 = arith.constant 0 : i32
    %c0_i32_0 = arith.constant 0 : i32
    %c0_i32_1 = arith.constant 0 : i32
    return %c0_i32, %c0_i32_0 : i32, i32
  }
  func.func @transform_3(%arg0: i32) -> (i32, i32) {
    %c0_i32 = arith.constant 0 : i32
    %c0_i32_0 = arith.constant 0 : i32
    %c0_i32_1 = arith.constant 0 : i32
    return %c0_i32, %c0_i32_0 : i32, i32
  }
  func.func @transform_4(%arg0: i32) -> (i32, i32) {
    %c0_i32 = arith.constant 0 : i32
    %c0_i32_0 = arith.constant 0 : i32
    %c0_i32_1 = arith.constant 0 : i32
    return %c0_i32, %c0_i32_0 : i32, i32
  }
  func.func @transform_5(%arg0: i32) -> (i32, i32) {
    %c0_i32 = arith.constant 0 : i32
    %c0_i32_0 = arith.constant 0 : i32
    %c0_i32_1 = arith.constant 0 : i32
    return %c0_i32, %c0_i32_0 : i32, i32
  }
  func.func @transform_7(%arg0: i32) -> (i32, i32) {
    %c0_i32 = arith.constant 0 : i32
    %c0_i32_0 = arith.constant 0 : i32
    %c0_i32_1 = arith.constant 0 : i32
    return %c0_i32, %c0_i32_0 : i32, i32
  }
}

</mosaic_0001>

<llo_original>
// kernel: tpu_custom_call.1
$region0: #{tpu_custom_call.1}
  #allocation0 [shape = 'u32[]', space=smem, size = 0x4, offset = 0x4, fixed_abs, tag = 'smem constant byte address 0x4 - core index']
  #allocation1 [shape = 'u32[144,128]{1,0:T(1,128)}', space=vmem, size = 0x12000, scoped, tag = 'internal scratch']
  #allocation2 [shape = 'f32[8,8,128]{2,1,0:T(8,128)}', space=vmem, size = 0x8000, scoped, tag = 'scratch operand']
  #allocation3 [shape = 'f32[8,8,384]{2,1,0:T(8,128)}', space=vmem, size = 0x18000, scoped, tag = 'scratch operand']
  #allocation4 [shape = 'f32[8,8,128]{2,1,0:T(8,128)}', space=vmem, size = 0x8000, scoped, tag = 'scratch operand']
  #allocation13 [shape = 's32[]', space=sflag, size = 0x4, offset = 0, fixed_abs, tag = 'sflag constant byte address 0x0 - dummy sync flag']
  #allocation14 [shape = 's32[]', space=sflag, size = 0x4, offset = 0, fixed_abs, tag = 'sflag constant byte address 0x0 - dummy sync flag']
  #allocation15 [shape = 'u32[]', space=smem, size = 0x4, offset = 0x44, fixed_abs, tag = 'smem constant byte address 0x44 - assertion arg 0']
  #allocation16 [shape = 'u32[]', space=smem, size = 0x4, offset = 0x48, fixed_abs, tag = 'smem constant byte address 0x48 - assertion arg 1']
  #allocation18 [shape = 's32[]', space=sflag, size = 0x4, offset = 0, fixed_abs, tag = 'sflag constant byte address 0x0 - dummy sync flag']
  #allocation19 [shape = 's32[]', space=sflag, size = 0x4, offset = 0, fixed_abs, tag = 'sflag constant byte address 0x0 - dummy sync flag']
  %s0 = inlined_call_operand.hbm [shape: f32[8,8,128], index: 0, kind: input, shape index: {}]
  %s1 = inlined_call_operand.hbm [shape: f32[8,128], index: 1, kind: input, shape index: {}]
  %s2 = inlined_call_operand.hbm [shape: bf16[128,384], index: 2, kind: input, shape index: {}]
  %s3 = inlined_call_operand.hbm [shape: bf16[128,384], index: 3, kind: input, shape index: {}]
  %s4 = inlined_call_operand.vmem [shape: f32[1,384], index: 4, kind: input, shape index: {}]
  %s5 = inlined_call_operand.vmem [shape: f32[1,128], index: 5, kind: input, shape index: {}]
  %s6 = inlined_call_operand.hbm [shape: f32[8,8,128], index: 6, kind: output, shape index: {0}]
  %s7 = inlined_call_operand.hbm [shape: f32[8,128], index: 7, kind: output, shape index: {1}]
  %8 = xla_tuple %s6, %s7
  %s9 = sld [smem:[#allocation0]]
  $region63: #{tpu_custom_call.1} parent=0
    _
  %s11 = ssub.s32 1, %s9
  %s12 = scalar_select 0, %s11, %s9
  $region1: #{tpu_custom_call.1} parent=0
    #allocation5 [shape = 'u8[4096]{0}', space=vmem, size = 0x1000, scoped, tag = 'input window, operand 1, single buffered']
    #allocation6 [shape = 's32[1]{0}', space=sflag, size = 0x4, scoped, tag = 'scoped memory for tpu_custom_call.1']
    #allocation7 [shape = 's32[1]{0}', space=sflag, size = 0x4, scoped, tag = 'scoped memory for tpu_custom_call.1']
    #allocation8 [shape = 'u8[98304]{0}', space=vmem, size = 0x18000, scoped, tag = 'input window, operand 2, single buffered']
    #allocation9 [shape = 's32[1]{0}', space=sflag, size = 0x4, scoped, tag = 'scoped memory for tpu_custom_call.1']
    #allocation10 [shape = 'u8[98304]{0}', space=vmem, size = 0x18000, scoped, tag = 'input window, operand 3, single buffered']
    #allocation11 [shape = 'u8[4096]{0}', space=vmem, size = 0x1000, scoped, tag = 'output window, operand 1, single buffered']
    %13 = vsyncpa [#allocation6], 0
    %14 = vsyncpa [#allocation9], 0
    %15 = vsyncpa [#allocation7], 0
    // Predicated region
    $region2: #{tpu_custom_call.1} parent=1 // pred_check
      _
    $region3: #{tpu_custom_call.1} parent=1 // pred_check_branch
      %17 = sbr.rel (0) target = $region5
    $region4: #{tpu_custom_call.1} parent=1 // pred_region
      %s19 = ssub.s32 128, 128
      %20 = vsyncadd [#allocation6], %s19
      %s22 = sshll.u32 [#allocation5], 4
      %s23 = int_to_ptr.vmem [resolvable:$true] %s22
      %25 = dma.hbm_to_vmem [thread:$0]  %s1, 128, %s23, [#allocation6]
    $region5: #{tpu_custom_call.1} parent=1 // pred_fallthru
      _
    // Predicated region
    $region6: #{tpu_custom_call.1} parent=1 // pred_check
      _
    $region7: #{tpu_custom_call.1} parent=1 // pred_check_branch
      %27 = sbr.rel (0) target = $region9
    $region8: #{tpu_custom_call.1} parent=1 // pred_region
      %s29 = ssub.s32 3072, 3072
      %30 = vsyncadd [#allocation9], %s29
      %s31 = sshll.u32 [#allocation8], 4
      %s32 = int_to_ptr.vmem [resolvable:$true] %s31
      %37 = dma.hbm_to_vmem [thread:$0]  %s2, 3072, %s32, [#allocation9], 192, 192, 12
    $region9: #{tpu_custom_call.1} parent=1 // pred_fallthru
      _
    // Predicated region
    $region10: #{tpu_custom_call.1} parent=1 // pred_check
      _
    $region11: #{tpu_custom_call.1} parent=1 // pred_check_branch
      %39 = sbr.rel (0) target = $region13
    $region12: #{tpu_custom_call.1} parent=1 // pred_region
      %s41 = ssub.s32 3072, 3072
      %42 = vsyncadd [#allocation9], %s41
      %s43 = sshll.u32 [#allocation10], 4
      %s44 = int_to_ptr.vmem [resolvable:$true] %s43
      %49 = dma.hbm_to_vmem [thread:$0]  %s3, 3072, %s44, [#allocation9], 192, 192, 12
    $region13: #{tpu_custom_call.1} parent=1 // pred_fallthru
      _
    // Predicated region
    $region14: #{tpu_custom_call.1} parent=1 // pred_check
      _
    $region15: #{tpu_custom_call.1} parent=1 // pred_check_branch
      %51 = sbr.rel (0) target = $region17
    $region16: #{tpu_custom_call.1} parent=1 // pred_region
      _
    $region17: #{tpu_custom_call.1} parent=1 // pred_fallthru
      _
    // Predicated region
    $region18: #{tpu_custom_call.1} parent=1 // pred_check
      _
    $region19: #{tpu_custom_call.1} parent=1 // pred_check_branch
      %53 = sbr.rel (0) target = $region21
    $region20: #{tpu_custom_call.1} parent=1 // pred_region
      _
    $region21: #{tpu_custom_call.1} parent=1 // pred_fallthru
      _
    // Predicated region
    $region22: #{tpu_custom_call.1} parent=1 // pred_check
      _
    $region23: #{tpu_custom_call.1} parent=1 // pred_check_branch
      %55 = sbr.rel (0) target = $region25
    $region24: #{tpu_custom_call.1} parent=1 // pred_region
      %56 = dma.done [#allocation6], 128
    $region25: #{tpu_custom_call.1} parent=1 // pred_fallthru
      _
    // Predicated region
    $region26: #{tpu_custom_call.1} parent=1 // pred_check
      _
    $region27: #{tpu_custom_call.1} parent=1 // pred_check_branch
      %58 = sbr.rel (0) target = $region29
    $region28: #{tpu_custom_call.1} parent=1 // pred_region
      %59 = dma.done [#allocation9], 3072
    $region29: #{tpu_custom_call.1} parent=1 // pred_fallthru
      _
    // Predicated region
    $region30: #{tpu_custom_call.1} parent=1 // pred_check
      _
    $region31: #{tpu_custom_call.1} parent=1 // pred_check_branch
      %61 = sbr.rel (0) target = $region33
    $region32: #{tpu_custom_call.1} parent=1 // pred_region
      %62 = dma.done [#allocation9], 3072
    $region33: #{tpu_custom_call.1} parent=1 // pred_fallthru
      _
    $region34: #{tpu_custom_call.1} parent=1
      #allocation12 [shape = 's32[1]{0}', space=sflag, size = 0x4, scoped, tag = 'scoped memory for tpu_custom_call.1']
      // Predicated region
      $region35: #{tpu_custom_call.1} parent=34 // pred_check
        _
      $region36: #{tpu_custom_call.1} parent=34 // pred_check_branch
        %65 = sbr.rel target = $region38
      $region37: #{tpu_custom_call.1} parent=34 // pred_region
        %66 = sst [smem:[#allocation15]] [#allocation14]
        %67 = sst [smem:[#allocation16]] [#allocation13]
      $region38: #{tpu_custom_call.1} parent=34 // pred_fallthru
        _
      %69 = shalt.err (0)
      %s71 = sshll.u32 [#allocation2], 4
      %s72 = int_to_ptr.vmem [resolvable:$true] %s71
      %74 = dma.hbm_to_vmem [thread:$0]  %s0, 1024, %s72, [#allocation12]
      %s75 = smul.u32 8, 8
      %s76 = smul.u32 %s75, 1
      %s77 = sshll.u32 %s76, 4
      %78 = dma.done [#allocation12], %s77
    %v79 = vld [vmem:[#allocation8] sm:$0xff]
    %v80 = vld [vmem:[#allocation8 + $0x8] sm:$0xf]
    %v81 = vld [vmem:[#allocation8 + $0xc] sm:$0xff]
    %v82 = vld [vmem:[#allocation8 + $0x14] sm:$0xf]
    %v83 = vld [vmem:[#allocation8 + $0x18] sm:$0xff]
    %v84 = vld [vmem:[#allocation8 + $0x20] sm:$0xf]
    %v85 = vld [vmem:[#allocation8 + $0x24] sm:$0xff]
    %v86 = vld [vmem:[#allocation8 + $0x2c] sm:$0xf]
    %v87 = vld [vmem:[#allocation8 + $0x30] sm:$0xff]
    %v88 = vld [vmem:[#allocation8 + $0x38] sm:$0xf]
    %v89 = vld [vmem:[#allocation8 + $0x3c] sm:$0xff]
    %v90 = vld [vmem:[#allocation8 + $0x44] sm:$0xf]
    %v91 = vld [vmem:[#allocation8 + $0x48] sm:$0xff]
    %v92 = vld [vmem:[#allocation8 + $0x50] sm:$0xf]
    %v93 = vld [vmem:[#allocation8 + $0x54] sm:$0xff]
    %v94 = vld [vmem:[#allocation8 + $0x5c] sm:$0xf]
    %v95 = vld [vmem:[#allocation8 + $0x60] sm:$0xff]
    %v96 = vld [vmem:[#allocation8 + $0x68] sm:$0xf]
    %v97 = vld [vmem:[#allocation8 + $0x6c] sm:$0xff]
    %v98 = vld [vmem:[#allocation8 + $0x74] sm:$0xf]
    %v99 = vld [vmem:[#allocation8 + $0x78] sm:$0xff]
    %v100 = vld [vmem:[#allocation8 + $0x80] sm:$0xf]
    %v101 = vld [vmem:[#allocation8 + $0x84] sm:$0xff]
    %v102 = vld [vmem:[#allocation8 + $0x8c] sm:$0xf]
    %v103 = vld [vmem:[#allocation8 + $0x90] sm:$0xff]
    %v104 = vld [vmem:[#allocation8 + $0x98] sm:$0xf]
    %v105 = vld [vmem:[#allocation8 + $0x9c] sm:$0xff]
    %v106 = vld [vmem:[#allocation8 + $0xa4] sm:$0xf]
    %v107 = vld [vmem:[#allocation8 + $0xa8] sm:$0xff]
    %v108 = vld [vmem:[#allocation8 + $0xb0] sm:$0xf]
    %v109 = vld [vmem:[#allocation8 + $0xb4] sm:$0xff]
    %v110 = vld [vmem:[#allocation8 + $0xbc] sm:$0xf]
    %v111 = vld [vmem:[#allocation10] sm:$0xff]
    %v112 = vld [vmem:[#allocation10 + $0x8] sm:$0xf]
    %v113 = vld [vmem:[#allocation10 + $0xc] sm:$0xff]
    %v114 = vld [vmem:[#allocation10 + $0x14] sm:$0xf]
    %v115 = vld [vmem:[#allocation10 + $0x18] sm:$0xff]
    %v116 = vld [vmem:[#allocation10 + $0x20] sm:$0xf]
    %v117 = vld [vmem:[#allocation10 + $0x24] sm:$0xff]
    %v118 = vld [vmem:[#allocation10 + $0x2c] sm:$0xf]
    %v119 = vld [vmem:[#allocation10 + $0x30] sm:$0xff]
    %v120 = vld [vmem:[#allocation10 + $0x38] sm:$0xf]
    %v121 = vld [vmem:[#allocation10 + $0x3c] sm:$0xff]
    %v122 = vld [vmem:[#allocation10 + $0x44] sm:$0xf]
    %v123 = vld [vmem:[#allocation10 + $0x48] sm:$0xff]
    %v124 = vld [vmem:[#allocation10 + $0x50] sm:$0xf]
    %v125 = vld [vmem:[#allocation10 + $0x54] sm:$0xff]
    %v126 = vld [vmem:[#allocation10 + $0x5c] sm:$0xf]
    %v127 = vld [vmem:[#allocation10 + $0x60] sm:$0xff]
    %v128 = vld [vmem:[#allocation10 + $0x68] sm:$0xf]
    %v129 = vld [vmem:[#allocation10 + $0x6c] sm:$0xff]
    %v130 = vld [vmem:[#allocation10 + $0x74] sm:$0xf]
    %v131 = vld [vmem:[#allocation10 + $0x78] sm:$0xff]
    %v132 = vld [vmem:[#allocation10 + $0x80] sm:$0xf]
    %v133 = vld [vmem:[#allocation10 + $0x84] sm:$0xff]
    %v134 = vld [vmem:[#allocation10 + $0x8c] sm:$0xf]
    %v135 = vld [vmem:[#allocation10 + $0x90] sm:$0xff]
    %v136 = vld [vmem:[#allocation10 + $0x98] sm:$0xf]
    %v137 = vld [vmem:[#allocation10 + $0x9c] sm:$0xff]
    %v138 = vld [vmem:[#allocation10 + $0xa4] sm:$0xf]
    %v139 = vld [vmem:[#allocation10 + $0xa8] sm:$0xff]
    %v140 = vld [vmem:[#allocation10 + $0xb0] sm:$0xf]
    %v141 = vld [vmem:[#allocation10 + $0xb4] sm:$0xff]
    %v142 = vld [vmem:[#allocation10 + $0xbc] sm:$0xf]
    %v143 = vld [vmem:[%s4] sm:$0x7]
    %v144 = vld [vmem:[%s5] sm:$0x1]
    %s145 = smul.u32 0, 8
    %s146 = scalar_lea.vmem [#allocation2], %s145
    %v147 = vld [vmem:[%s146] sm:$0xff]
    %v148 = vld [vmem:[%s146 + $0x8] sm:$0xff]
    %v149 = vld [vmem:[%s146 + $0x10] sm:$0xff]
    %v150 = vld [vmem:[%s146 + $0x18] sm:$0xff]
    %v151 = vpack.c.bf16 %v148, %v147
    %v152 = vpack.c.bf16 %v150, %v149
    %v154 = vlaneseq
    %v155 = vshrl.u32 %v154, 7
    %v156 = vsub.s32 0, %v155
    %v157 = vrot.slane %v143, %v156
    %v158 = vlaneseq
    %v159 = vshrl.u32 %v158, 7
    %v160 = vsub.s32 1, %v159
    %v161 = vrot.slane %v143, %v160
    %v162 = vlaneseq
    %v163 = vshrl.u32 %v162, 7
    %v164 = vsub.s32 2, %v163
    %v165 = vrot.slane %v143, %v164
    %v201 = vunpack.c.l.b16 %v79
    %v202 = vunpack.c.h.b16 %v79
    %v203 = vunpack.c.l.b16 %v80
    %v204 = vunpack.c.l.b16 %v81
    %v205 = vunpack.c.h.b16 %v81
    %v206 = vunpack.c.l.b16 %v82
    %v207 = vunpack.c.l.b16 %v83
    %v208 = vunpack.c.h.b16 %v83
    %v209 = vunpack.c.l.b16 %v84
    %v210 = vunpack.c.l.b16 %v85
    %v211 = vunpack.c.h.b16 %v85
    %v212 = vunpack.c.l.b16 %v86
    %v213 = vunpack.c.l.b16 %v87
    %v214 = vunpack.c.h.b16 %v87
    %v215 = vunpack.c.l.b16 %v88
    %v216 = vunpack.c.l.b16 %v89
    %v217 = vunpack.c.h.b16 %v89
    %v218 = vunpack.c.l.b16 %v90
    %v219 = vunpack.c.l.b16 %v91
    %v220 = vunpack.c.h.b16 %v91
    %v221 = vunpack.c.l.b16 %v92
    %v222 = vunpack.c.l.b16 %v93
    %v223 = vunpack.c.h.b16 %v93
    %v224 = vunpack.c.l.b16 %v94
    %v225 = vunpack.c.l.b16 %v95
    %v226 = vunpack.c.h.b16 %v95
    %v227 = vunpack.c.l.b16 %v96
    %v228 = vunpack.c.l.b16 %v97
    %v229 = vunpack.c.h.b16 %v97
    %v230 = vunpack.c.l.b16 %v98
    %v231 = vunpack.c.l.b16 %v99
    %v232 = vunpack.c.h.b16 %v99
    %v233 = vunpack.c.l.b16 %v100
    %v234 = vunpack.c.l.b16 %v101
    %v235 = vunpack.c.h.b16 %v101
    %v236 = vunpack.c.l.b16 %v102
    %v237 = vunpack.c.l.b16 %v103
    %v238 = vunpack.c.h.b16 %v103
    %v239 = vunpack.c.l.b16 %v104
    %v240 = vunpack.c.l.b16 %v105
    %v241 = vunpack.c.h.b16 %v105
    %v242 = vunpack.c.l.b16 %v106
    %v243 = vunpack.c.l.b16 %v107
    %v244 = vunpack.c.h.b16 %v107
    %v245 = vunpack.c.l.b16 %v108
    %v246 = vunpack.c.l.b16 %v109
    %v247 = vunpack.c.h.b16 %v109
    %v248 = vunpack.c.l.b16 %v110
    %v249 = vpack.c.b16 %v204, %v201
    %v250 = vpack.c.b16 %v205, %v202
    %v251 = vpack.c.b16 %v206, %v203
    %v252 = vpack.c.b16 %v210, %v207
    %v253 = vpack.c.b16 %v211, %v208
    %v254 = vpack.c.b16 %v212, %v209
    %v255 = vpack.c.b16 %v216, %v213
    %v256 = vpack.c.b16 %v217, %v214
    %v257 = vpack.c.b16 %v218, %v215
    %v258 = vpack.c.b16 %v222, %v219
    %v259 = vpack.c.b16 %v223, %v220
    %v260 = vpack.c.b16 %v224, %v221
    %v261 = vpack.c.b16 %v228, %v225
    %v262 = vpack.c.b16 %v229, %v226
    %v263 = vpack.c.b16 %v230, %v227
    %v264 = vpack.c.b16 %v234, %v231
    %v265 = vpack.c.b16 %v235, %v232
    %v266 = vpack.c.b16 %v236, %v233
    %v267 = vpack.c.b16 %v240, %v237
    %v268 = vpack.c.b16 %v241, %v238
    %v269 = vpack.c.b16 %v242, %v239
    %v270 = vpack.c.b16 %v246, %v243
    %v271 = vpack.c.b16 %v247, %v244
    %v272 = vpack.c.b16 %v248, %v245
    %297 = vmatprep.subr.bf16.mxu0 %v271
    %298 = vmatpush1.bf16.msra.mxu0 %v270
    %299 = vmatprep.subr.bf16.mxu0 %v268
    %300 = vmatpush1.bf16.msra.mxu0 %v267
    %301 = vmatprep.subr.bf16.mxu0 %v265
    %302 = vmatpush1.bf16.msra.mxu0 %v264
    %303 = vmatprep.subr.bf16.mxu0 %v262
    %304 = vmatpush1.bf16.msra.mxu0 %v261
    %305 = vmatprep.subr.bf16.mxu0 %v259
    %306 = vmatpush1.bf16.msra.mxu0 %v258
    %307 = vmatprep.subr.bf16.mxu0 %v256
    %308 = vmatpush1.bf16.msra.mxu0 %v255
    %309 = vmatprep.subr.bf16.mxu0 %v253
    %310 = vmatpush1.bf16.msra.mxu0 %v252
    %311 = vmatprep.subr.bf16.mxu0 %v250
    %312 = vmatpush1.bf16.msra.mxu0 %v249
    %313 = vmatprep.subr.bf16.mxu0 0
    %314 = vmatpush2.bf16.msra.mxu0 0
    %315 = vmatprep.subr.bf16.mxu0 0
    %316 = vmatpush2.bf16.msra.mxu0 0
    %317 = vmatprep.subr.bf16.mxu0 0
    %318 = vmatpush2.bf16.msra.mxu0 0
    %319 = vmatprep.subr.bf16.mxu0 0
    %320 = vmatpush2.bf16.msra.mxu0 0
    %321 = vmatprep.subr.bf16.mxu0 0
    %322 = vmatpush2.bf16.msra.mxu0 0
    %323 = vmatprep.subr.bf16.mxu0 0
    %324 = vmatpush2.bf16.msra.mxu0 0
    %325 = vmatprep.subr.bf16.mxu0 0
    %326 = vmatpush2.bf16.msra.mxu0 0
    %327 = vmatprep.subr.bf16.mxu0 0
    %328 = vmatpush2.bf16.msra.mxu0 0
    %329 = vmatprep.mubr.bf16.mxu0 0
    %330 = vmatmul.mubr.bf16.gmra.mxu0 %v151
    %v331 = vpop.f32.mrf.mxu0
    %v332 = vadd.f32 %v157, %v331
    %v333 = vpop.f32.mrf.mxu0
    %v334 = vadd.f32 %v161, %v333
    %v335 = vpop.f32.mrf.mxu0
    %v336 = vadd.f32 %v157, %v335
    %v337 = vpop.f32.mrf.mxu0
    %v338 = vadd.f32 %v161, %v337
    %339 = vmatprep.mubr.bf16.mxu0 0
    %340 = vmatmul.mubr.bf16.gmra.mxu0 %v152
    %v341 = vpop.f32.mrf.mxu0
    %v342 = vadd.f32 %v157, %v341
    %v343 = vpop.f32.mrf.mxu0
    %v344 = vadd.f32 %v161, %v343
    %v345 = vpop.f32.mrf.mxu0
    %v346 = vadd.f32 %v157, %v345
    %v347 = vpop.f32.mrf.mxu0
    %v348 = vadd.f32 %v161, %v347
    %349 = vdwg.mxu0
    %350 = vmatprep.subr.bf16.mxu0 0
    %351 = vmatpush1.bf16.msra.mxu0 %v272
    %352 = vmatprep.subr.bf16.mxu0 0
    %353 = vmatpush1.bf16.msra.mxu0 %v269
    %354 = vmatprep.subr.bf16.mxu0 0
    %355 = vmatpush1.bf16.msra.mxu0 %v266
    %356 = vmatprep.subr.bf16.mxu0 0
    %357 = vmatpush1.bf16.msra.mxu0 %v263
    %358 = vmatprep.subr.bf16.mxu0 0
    %359 = vmatpush1.bf16.msra.mxu0 %v260
    %360 = vmatprep.subr.bf16.mxu0 0
    %361 = vmatpush1.bf16.msra.mxu0 %v257
    %362 = vmatprep.subr.bf16.mxu0 0
    %363 = vmatpush1.bf16.msra.mxu0 %v254
    %364 = vmatprep.subr.bf16.mxu0 0
    %365 = vmatpush1.bf16.msra.mxu0 %v251
    %366 = vmatprep.subr.bf16.mxu0 0
    %367 = vmatpush2.bf16.msra.mxu0 0
    %368 = vmatprep.subr.bf16.mxu0 0
    %369 = vmatpush2.bf16.msra.mxu0 0
    %370 = vmatprep.subr.bf16.mxu0 0
    %371 = vmatpush2.bf16.msra.mxu0 0
    %372 = vmatprep.subr.bf16.mxu0 0
    %373 = vmatpush2.bf16.msra.mxu0 0
    %374 = vmatprep.subr.bf16.mxu0 0
    %375 = vmatpush2.bf16.msra.mxu0 0
    %376 = vmatprep.subr.bf16.mxu0 0
    %377 = vmatpush2.bf16.msra.mxu0 0
    %378 = vmatprep.subr.bf16.mxu0 0
    %379 = vmatpush2.bf16.msra.mxu0 0
    %380 = vmatprep.subr.bf16.mxu0 0
    %381 = vmatpush2.bf16.msra.mxu0 0
    %382 = vmatprep.mubr.bf16.mxu0 0
    %383 = vmatmul.mubr.bf16.gmra.mxu0 %v151
    %v384 = vpop.f32.mrf.mxu0
    %v385 = vadd.f32 %v165, %v384
    %v386 = vpop.f32.mrf.mxu0
    %v387 = vpop.f32.mrf.mxu0
    %v388 = vadd.f32 %v165, %v387
    %v389 = vpop.f32.mrf.mxu0
    %390 = vmatprep.mubr.bf16.mxu0 0
    %391 = vmatmul.mubr.bf16.gmra.mxu0 %v152
    %v392 = vpop.f32.mrf.mxu0
    %v393 = vadd.f32 %v165, %v392
    %v394 = vpop.f32.mrf.mxu0
    %v395 = vpop.f32.mrf.mxu0
    %v396 = vadd.f32 %v165, %v395
    %v397 = vpop.f32.mrf.mxu0
    %398 = vdwg.mxu0
    %s399 = smul.u32 0, 3
    %s400 = smul.addr %s399, 8
    %s401 = scalar_lea.vmem [#allocation3], %s400
    %402 = vst [vmem:[%s401] sm:$0xff] %v332
    %403 = vst [vmem:[%s401 + $0x8] sm:$0xff] %v334
    %404 = vst [vmem:[%s401 + $0x10] sm:$0xff] %v385
    %405 = vst [vmem:[%s401 + $0x18] sm:$0xff] %v336
    %406 = vst [vmem:[%s401 + $0x20] sm:$0xff] %v338
    %407 = vst [vmem:[%s401 + $0x28] sm:$0xff] %v388
    %408 = vst [vmem:[%s401 + $0x30] sm:$0xff] %v342
    %409 = vst [vmem:[%s401 + $0x38] sm:$0xff] %v344
    %410 = vst [vmem:[%s401 + $0x40] sm:$0xff] %v393
    %411 = vst [vmem:[%s401 + $0x48] sm:$0xff] %v346
    %412 = vst [vmem:[%s401 + $0x50] sm:$0xff] %v348
    %413 = vst [vmem:[%s401 + $0x58] sm:$0xff] %v396
    %v414 = vld [vmem:[#allocation5] sm:$0xff]
    loop: start=0, step=1, limit=2
    $region39: #{tpu_custom_call.1} parent=1 // loop_pre_header
      _
    $region40: #{tpu_custom_call.1} parent=1 // loop_header
      %s416 = sphi 0, %s420
      %p417 = scmp.ge.s32.totalorder %s416, 2
      %v421 = vphi %v414, %v1139
    $region41: #{tpu_custom_call.1} parent=1 // loop_header_branch
      %419 = sbr.rel (%p417) target = $region45
    $region42: #{tpu_custom_call.1} parent=1 // loop_body
      %s422 = sadd.s32 %s416, 1
      %p423 = scmp.lt.s32.totalorder %s422, 2
      // Predicated region
      $region46: #{tpu_custom_call.1} parent=42 // pred_check
        %p424 = pneg %p423
      $region47: #{tpu_custom_call.1} parent=42 // pred_check_branch
        %426 = sbr.rel (%p424) target = $region49
      $region48: #{tpu_custom_call.1} parent=42 // pred_region
        %s427 = smul.u32 %s422, 4
        %s428 = smul.u32 %s427, 8
        %s429 = scalar_lea.vmem [#allocation2], %s428
        %v430 = vld [vmem:[%s429] sm:$0xff]
        %v431 = vld [vmem:[%s429 + $0x8] sm:$0xff]
        %v432 = vld [vmem:[%s429 + $0x10] sm:$0xff]
        %v433 = vld [vmem:[%s429 + $0x18] sm:$0xff]
        %v434 = vpack.c.bf16 %v431, %v430
        %v435 = vpack.c.bf16 %v433, %v432
        %436 = vmatprep.subr.bf16.mxu0 %v271
        %437 = vmatpush1.bf16.msra.mxu0 %v270
        %438 = vmatprep.subr.bf16.mxu0 %v268
        %439 = vmatpush1.bf16.msra.mxu0 %v267
        %440 = vmatprep.subr.bf16.mxu0 %v265
        %441 = vmatpush1.bf16.msra.mxu0 %v264
        %442 = vmatprep.subr.bf16.mxu0 %v262
        %443 = vmatpush1.bf16.msra.mxu0 %v261
        %444 = vmatprep.subr.bf16.mxu0 %v259
        %445 = vmatpush1.bf16.msra.mxu0 %v258
        %446 = vmatprep.subr.bf16.mxu0 %v256
        %447 = vmatpush1.bf16.msra.mxu0 %v255
        %448 = vmatprep.subr.bf16.mxu0 %v253
        %449 = vmatpush1.bf16.msra.mxu0 %v252
        %450 = vmatprep.subr.bf16.mxu0 %v250
        %451 = vmatpush1.bf16.msra.mxu0 %v249
        %452 = vmatprep.subr.bf16.mxu0 0
        %453 = vmatpush2.bf16.msra.mxu0 0
        %454 = vmatprep.subr.bf16.mxu0 0
        %455 = vmatpush2.bf16.msra.mxu0 0
        %456 = vmatprep.subr.bf16.mxu0 0
        %457 = vmatpush2.bf16.msra.mxu0 0
        %458 = vmatprep.subr.bf16.mxu0 0
        %459 = vmatpush2.bf16.msra.mxu0 0
        %460 = vmatprep.subr.bf16.mxu0 0
        %461 = vmatpush2.bf16.msra.mxu0 0
        %462 = vmatprep.subr.bf16.mxu0 0
        %463 = vmatpush2.bf16.msra.mxu0 0
        %464 = vmatprep.subr.bf16.mxu0 0
        %465 = vmatpush2.bf16.msra.mxu0 0
        %466 = vmatprep.subr.bf16.mxu0 0
        %467 = vmatpush2.bf16.msra.mxu0 0
        %468 = vmatprep.mubr.bf16.mxu0 0
        %469 = vmatmul.mubr.bf16.gmra.mxu0 %v434
        %v470 = vpop.f32.mrf.mxu0
        %v471 = vadd.f32 %v157, %v470
        %v472 = vpop.f32.mrf.mxu0
        %v473 = vadd.f32 %v161, %v472
        %v474 = vpop.f32.mrf.mxu0
        %v475 = vadd.f32 %v157, %v474
        %v476 = vpop.f32.mrf.mxu0
        %v477 = vadd.f32 %v161, %v476
        %478 = vmatprep.mubr.bf16.mxu0 0
        %479 = vmatmul.mubr.bf16.gmra.mxu0 %v435
        %v480 = vpop.f32.mrf.mxu0
        %v481 = vadd.f32 %v157, %v480
        %v482 = vpop.f32.mrf.mxu0
        %v483 = vadd.f32 %v161, %v482
        %v484 = vpop.f32.mrf.mxu0
        %v485 = vadd.f32 %v157, %v484
        %v486 = vpop.f32.mrf.mxu0
        %v487 = vadd.f32 %v161, %v486
        %488 = vdwg.mxu0
        %489 = vmatprep.subr.bf16.mxu0 0
        %490 = vmatpush1.bf16.msra.mxu0 %v272
        %491 = vmatprep.subr.bf16.mxu0 0
        %492 = vmatpush1.bf16.msra.mxu0 %v269
        %493 = vmatprep.subr.bf16.mxu0 0
        %494 = vmatpush1.bf16.msra.mxu0 %v266
        %495 = vmatprep.subr.bf16.mxu0 0
        %496 = vmatpush1.bf16.msra.mxu0 %v263
        %497 = vmatprep.subr.bf16.mxu0 0
        %498 = vmatpush1.bf16.msra.mxu0 %v260
        %499 = vmatprep.subr.bf16.mxu0 0
        %500 = vmatpush1.bf16.msra.mxu0 %v257
        %501 = vmatprep.subr.bf16.mxu0 0
        %502 = vmatpush1.bf16.msra.mxu0 %v254
        %503 = vmatprep.subr.bf16.mxu0 0
        %504 = vmatpush1.bf16.msra.mxu0 %v251
        %505 = vmatprep.subr.bf16.mxu0 0
        %506 = vmatpush2.bf16.msra.mxu0 0
        %507 = vmatprep.subr.bf16.mxu0 0
        %508 = vmatpush2.bf16.msra.mxu0 0
        %509 = vmatprep.subr.bf16.mxu0 0
        %510 = vmatpush2.bf16.msra.mxu0 0
        %511 = vmatprep.subr.bf16.mxu0 0
        %512 = vmatpush2.bf16.msra.mxu0 0
        %513 = vmatprep.subr.bf16.mxu0 0
        %514 = vmatpush2.bf16.msra.mxu0 0
        %515 = vmatprep.subr.bf16.mxu0 0
        %516 = vmatpush2.bf16.msra.mxu0 0
        %517 = vmatprep.subr.bf16.mxu0 0
        %518 = vmatpush2.bf16.msra.mxu0 0
        %519 = vmatprep.subr.bf16.mxu0 0
        %520 = vmatpush2.bf16.msra.mxu0 0
        %521 = vmatprep.mubr.bf16.mxu0 0
        %522 = vmatmul.mubr.bf16.gmra.mxu0 %v434
        %v523 = vpop.f32.mrf.mxu0
        %v524 = vadd.f32 %v165, %v523
        %v525 = vpop.f32.mrf.mxu0
        %v526 = vpop.f32.mrf.mxu0
        %v527 = vadd.f32 %v165, %v526
        %v528 = vpop.f32.mrf.mxu0
        %529 = vmatprep.mubr.bf16.mxu0 0
        %530 = vmatmul.mubr.bf16.gmra.mxu0 %v435
        %v531 = vpop.f32.mrf.mxu0
        %v532 = vadd.f32 %v165, %v531
        %v533 = vpop.f32.mrf.mxu0
        %v534 = vpop.f32.mrf.mxu0
        %v535 = vadd.f32 %v165, %v534
        %v536 = vpop.f32.mrf.mxu0
        %537 = vdwg.mxu0
        %s538 = smul.u32 %s427, 3
        %s539 = smul.addr %s538, 8
        %s540 = scalar_lea.vmem [#allocation3], %s539
        %541 = vst [vmem:[%s540] sm:$0xff] %v471
        %542 = vst [vmem:[%s540 + $0x8] sm:$0xff] %v473
        %543 = vst [vmem:[%s540 + $0x10] sm:$0xff] %v524
        %544 = vst [vmem:[%s540 + $0x18] sm:$0xff] %v475
        %545 = vst [vmem:[%s540 + $0x20] sm:$0xff] %v477
        %546 = vst [vmem:[%s540 + $0x28] sm:$0xff] %v527
        %547 = vst [vmem:[%s540 + $0x30] sm:$0xff] %v481
        %548 = vst [vmem:[%s540 + $0x38] sm:$0xff] %v483
        %549 = vst [vmem:[%s540 + $0x40] sm:$0xff] %v532
        %550 = vst [vmem:[%s540 + $0x48] sm:$0xff] %v485
        %551 = vst [vmem:[%s540 + $0x50] sm:$0xff] %v487
        %552 = vst [vmem:[%s540 + $0x58] sm:$0xff] %v535
      $region49: #{tpu_custom_call.1} parent=42 // pred_fallthru
        _
      %s553 = smul.u32 %s416, 4
      %s554 = smul.u32 %s553, 3
      %s555 = smul.addr %s554, 8
      %s556 = scalar_lea.vmem [#allocation3], %s555
      %v557 = vld [vmem:[%s556] sm:$0xff]
      %v558 = vld [vmem:[%s556 + $0x8] sm:$0xff]
      %v559 = vld [vmem:[%s556 + $0x10] sm:$0xff]
      %v560 = vpack.c.bf16 %v421, %v421
      %v593 = vunpack.c.l.b16 %v111
      %v594 = vunpack.c.h.b16 %v111
      %v595 = vunpack.c.l.b16 %v112
      %v596 = vunpack.c.l.b16 %v113
      %v597 = vunpack.c.h.b16 %v113
      %v598 = vunpack.c.l.b16 %v114
      %v599 = vunpack.c.l.b16 %v115
      %v600 = vunpack.c.h.b16 %v115
      %v601 = vunpack.c.l.b16 %v116
      %v602 = vunpack.c.l.b16 %v117
      %v603 = vunpack.c.h.b16 %v117
      %v604 = vunpack.c.l.b16 %v118
      %v605 = vunpack.c.l.b16 %v119
      %v606 = vunpack.c.h.b16 %v119
      %v607 = vunpack.c.l.b16 %v120
      %v608 = vunpack.c.l.b16 %v121
      %v609 = vunpack.c.h.b16 %v121
      %v610 = vunpack.c.l.b16 %v122
      %v611 = vunpack.c.l.b16 %v123
      %v612 = vunpack.c.h.b16 %v123
      %v613 = vunpack.c.l.b16 %v124
      %v614 = vunpack.c.l.b16 %v125
      %v615 = vunpack.c.h.b16 %v125
      %v616 = vunpack.c.l.b16 %v126
      %v617 = vunpack.c.l.b16 %v127
      %v618 = vunpack.c.h.b16 %v127
      %v619 = vunpack.c.l.b16 %v128
      %v620 = vunpack.c.l.b16 %v129
      %v621 = vunpack.c.h.b16 %v129
      %v622 = vunpack.c.l.b16 %v130
      %v623 = vunpack.c.l.b16 %v131
      %v624 = vunpack.c.h.b16 %v131
      %v625 = vunpack.c.l.b16 %v132
      %v626 = vunpack.c.l.b16 %v133
      %v627 = vunpack.c.h.b16 %v133
      %v628 = vunpack.c.l.b16 %v134
      %v629 = vunpack.c.l.b16 %v135
      %v630 = vunpack.c.h.b16 %v135
      %v631 = vunpack.c.l.b16 %v136
      %v632 = vunpack.c.l.b16 %v137
      %v633 = vunpack.c.h.b16 %v137
      %v634 = vunpack.c.l.b16 %v138
      %v635 = vunpack.c.l.b16 %v139
      %v636 = vunpack.c.h.b16 %v139
      %v637 = vunpack.c.l.b16 %v140
      %v638 = vunpack.c.l.b16 %v141
      %v639 = vunpack.c.h.b16 %v141
      %v640 = vunpack.c.l.b16 %v142
      %v641 = vpack.c.b16 %v596, %v593
      %v642 = vpack.c.b16 %v597, %v594
      %v643 = vpack.c.b16 %v598, %v595
      %v644 = vpack.c.b16 %v602, %v599
      %v645 = vpack.c.b16 %v603, %v600
      %v646 = vpack.c.b16 %v604, %v601
      %v647 = vpack.c.b16 %v608, %v605
      %v648 = vpack.c.b16 %v609, %v606
      %v649 = vpack.c.b16 %v610, %v607
      %v650 = vpack.c.b16 %v614, %v611
      %v651 = vpack.c.b16 %v615, %v612
      %v652 = vpack.c.b16 %v616, %v613
      %v653 = vpack.c.b16 %v620, %v617
      %v654 = vpack.c.b16 %v621, %v618
      %v655 = vpack.c.b16 %v622, %v619
      %v656 = vpack.c.b16 %v626, %v623
      %v657 = vpack.c.b16 %v627, %v624
      %v658 = vpack.c.b16 %v628, %v625
      %v659 = vpack.c.b16 %v632, %v629
      %v660 = vpack.c.b16 %v633, %v630
      %v661 = vpack.c.b16 %v634, %v631
      %v662 = vpack.c.b16 %v638, %v635
      %v663 = vpack.c.b16 %v639, %v636
      %v664 = vpack.c.b16 %v640, %v637
      %689 = vmatprep.subr.bf16.mxu0 %v663
      %690 = vmatpush1.bf16.msra.mxu0 %v662
      %691 = vmatprep.subr.bf16.mxu0 %v660
      %692 = vmatpush1.bf16.msra.mxu0 %v659
      %693 = vmatprep.subr.bf16.mxu0 %v657
      %694 = vmatpush1.bf16.msra.mxu0 %v656
      %695 = vmatprep.subr.bf16.mxu0 %v654
      %696 = vmatpush1.bf16.msra.mxu0 %v653
      %697 = vmatprep.subr.bf16.mxu0 %v651
      %698 = vmatpush1.bf16.msra.mxu0 %v650
      %699 = vmatprep.subr.bf16.mxu0 %v648
      %700 = vmatpush1.bf16.msra.mxu0 %v647
      %701 = vmatprep.subr.bf16.mxu0 %v645
      %702 = vmatpush1.bf16.msra.mxu0 %v644
      %703 = vmatprep.subr.bf16.mxu0 %v642
      %704 = vmatpush1.bf16.msra.mxu0 %v641
      %705 = vmatprep.subr.bf16.mxu0 0
      %706 = vmatpush2.bf16.msra.mxu0 0
      %707 = vmatprep.subr.bf16.mxu0 0
      %708 = vmatpush2.bf16.msra.mxu0 0
      %709 = vmatprep.subr.bf16.mxu0 0
      %710 = vmatpush2.bf16.msra.mxu0 0
      %711 = vmatprep.subr.bf16.mxu0 0
      %712 = vmatpush2.bf16.msra.mxu0 0
      %713 = vmatprep.subr.bf16.mxu0 0
      %714 = vmatpush2.bf16.msra.mxu0 0
      %715 = vmatprep.subr.bf16.mxu0 0
      %716 = vmatpush2.bf16.msra.mxu0 0
      %717 = vmatprep.subr.bf16.mxu0 0
      %718 = vmatpush2.bf16.msra.mxu0 0
      %719 = vmatprep.subr.bf16.mxu0 0
      %720 = vmatpush2.bf16.msra.mxu0 0
      %721 = vmatprep.mubr.bf16.mxu0 0
      %722 = vmatmul.mubr.bf16.gmra.mxu0 %v560
      %v723 = vpop.f32.mrf.mxu0
      %v724 = vadd.f32 0.0, %v723
      %v725 = vpop.f32.mrf.mxu0
      %v726 = vadd.f32 0.0, %v725
      %v727 = vpop.f32.mrf.mxu0
      %v728 = vpop.f32.mrf.mxu0
      %729 = vdwg.mxu0
      %730 = vmatprep.subr.bf16.mxu0 0
      %731 = vmatpush1.bf16.msra.mxu0 %v664
      %732 = vmatprep.subr.bf16.mxu0 0
      %733 = vmatpush1.bf16.msra.mxu0 %v661
      %734 = vmatprep.subr.bf16.mxu0 0
      %735 = vmatpush1.bf16.msra.mxu0 %v658
      %736 = vmatprep.subr.bf16.mxu0 0
      %737 = vmatpush1.bf16.msra.mxu0 %v655
      %738 = vmatprep.subr.bf16.mxu0 0
      %739 = vmatpush1.bf16.msra.mxu0 %v652
      %740 = vmatprep.subr.bf16.mxu0 0
      %741 = vmatpush1.bf16.msra.mxu0 %v649
      %742 = vmatprep.subr.bf16.mxu0 0
      %743 = vmatpush1.bf16.msra.mxu0 %v646
      %744 = vmatprep.subr.bf16.mxu0 0
      %745 = vmatpush1.bf16.msra.mxu0 %v643
      %746 = vmatprep.subr.bf16.mxu0 0
      %747 = vmatpush2.bf16.msra.mxu0 0
      %748 = vmatprep.subr.bf16.mxu0 0
      %749 = vmatpush2.bf16.msra.mxu0 0
      %750 = vmatprep.subr.bf16.mxu0 0
      %751 = vmatpush2.bf16.msra.mxu0 0
      %752 = vmatprep.subr.bf16.mxu0 0
      %753 = vmatpush2.bf16.msra.mxu0 0
      %754 = vmatprep.subr.bf16.mxu0 0
      %755 = vmatpush2.bf16.msra.mxu0 0
      %756 = vmatprep.subr.bf16.mxu0 0
      %757 = vmatpush2.bf16.msra.mxu0 0
      %758 = vmatprep.subr.bf16.mxu0 0
      %759 = vmatpush2.bf16.msra.mxu0 0
      %760 = vmatprep.subr.bf16.mxu0 0
      %761 = vmatpush2.bf16.msra.mxu0 0
      %762 = vmatprep.mubr.bf16.mxu0 0
      %763 = vmatmul.mubr.bf16.gmra.mxu0 %v560
      %v764 = vpop.f32.mrf.mxu0
      %v765 = vadd.f32 0.0, %v764
      %v766 = vpop.f32.mrf.mxu0
      %v767 = vpop.f32.mrf.mxu0
      %v768 = vpop.f32.mrf.mxu0
      %769 = vdwg.mxu0
      %v770 = vadd.f32 %v557, %v724
      %v771 = vxor.u32 %v770, 2147483648
      %v772 = vmul.f32 %v771, 1.442695
      %v773 = vpow.pop %v772
      %v774 = vadd.f32 %v773, 1.0
      %v775 = vrcp.pop %v774
      %v776 = vmul.f32 1.0, %v775
      %v777 = vadd.f32 %v558, %v726
      %v778 = vxor.u32 %v777, 2147483648
      %v779 = vmul.f32 %v778, 1.442695
      %v780 = vpow.pop %v779
      %v781 = vadd.f32 %v780, 1.0
      %v782 = vrcp.pop %v781
      %v783 = vmul.f32 1.0, %v782
      %v785 = vlaneseq
      %v786 = vshrl.u32 %v785, 7
      %v787 = vsub.s32 0, %v786
      %v788 = vrot.slane %v144, %v787
      %v790 = vadd.f32 %v765, %v788
      %v791 = vmul.f32 %v776, %v790
      %v792 = vadd.f32 %v559, %v791
      %v793 = vtanh.pop %v792
      %v794 = vsub.f32 1.0, %v783
      %v795 = vmul.f32 %v794, %v793
      %v796 = vmul.f32 %v783, %v421
      %v797 = vadd.f32 %v795, %v796
      %s798 = smul.u32 %s553, 8
      %s799 = scalar_lea.vmem [#allocation4], %s798
      %800 = vst [vmem:[%s799] sm:$0xff] %v797
      %s801 = sadd.s32 %s553, 1
      %s802 = smul.u32 %s801, 3
      %s803 = smul.addr %s802, 8
      %s804 = scalar_lea.vmem [#allocation3], %s803
      %v805 = vld [vmem:[%s804] sm:$0xff]
      %v806 = vld [vmem:[%s804 + $0x8] sm:$0xff]
      %v807 = vld [vmem:[%s804 + $0x10] sm:$0xff]
      %v808 = vpack.c.bf16 %v797, %v797
      %809 = vmatprep.subr.bf16.mxu0 %v663
      %810 = vmatpush1.bf16.msra.mxu0 %v662
      %811 = vmatprep.subr.bf16.mxu0 %v660
      %812 = vmatpush1.bf16.msra.mxu0 %v659
      %813 = vmatprep.subr.bf16.mxu0 %v657
      %814 = vmatpush1.bf16.msra.mxu0 %v656
      %815 = vmatprep.subr.bf16.mxu0 %v654
      %816 = vmatpush1.bf16.msra.mxu0 %v653
      %817 = vmatprep.subr.bf16.mxu0 %v651
      %818 = vmatpush1.bf16.msra.mxu0 %v650
      %819 = vmatprep.subr.bf16.mxu0 %v648
      %820 = vmatpush1.bf16.msra.mxu0 %v647
      %821 = vmatprep.subr.bf16.mxu0 %v645
      %822 = vmatpush1.bf16.msra.mxu0 %v644
      %823 = vmatprep.subr.bf16.mxu0 %v642
      %824 = vmatpush1.bf16.msra.mxu0 %v641
      %825 = vmatprep.subr.bf16.mxu0 0
      %826 = vmatpush2.bf16.msra.mxu0 0
      %827 = vmatprep.subr.bf16.mxu0 0
      %828 = vmatpush2.bf16.msra.mxu0 0
      %829 = vmatprep.subr.bf16.mxu0 0
      %830 = vmatpush2.bf16.msra.mxu0 0
      %831 = vmatprep.subr.bf16.mxu0 0
      %832 = vmatpush2.bf16.msra.mxu0 0
      %833 = vmatprep.subr.bf16.mxu0 0
      %834 = vmatpush2.bf16.msra.mxu0 0
      %835 = vmatprep.subr.bf16.mxu0 0
      %836 = vmatpush2.bf16.msra.mxu0 0
      %837 = vmatprep.subr.bf16.mxu0 0
      %838 = vmatpush2.bf16.msra.mxu0 0
      %839 = vmatprep.subr.bf16.mxu0 0
      %840 = vmatpush2.bf16.msra.mxu0 0
      %841 = vmatprep.mubr.bf16.mxu0 0
      %842 = vmatmul.mubr.bf16.gmra.mxu0 %v808
      %v843 = vpop.f32.mrf.mxu0
      %v844 = vadd.f32 0.0, %v843
      %v845 = vpop.f32.mrf.mxu0
      %v846 = vadd.f32 0.0, %v845
      %v847 = vpop.f32.mrf.mxu0
      %v848 = vpop.f32.mrf.mxu0
      %849 = vdwg.mxu0
      %850 = vmatprep.subr.bf16.mxu0 0
      %851 = vmatpush1.bf16.msra.mxu0 %v664
      %852 = vmatprep.subr.bf16.mxu0 0
      %853 = vmatpush1.bf16.msra.mxu0 %v661
      %854 = vmatprep.subr.bf16.mxu0 0
      %855 = vmatpush1.bf16.msra.mxu0 %v658
      %856 = vmatprep.subr.bf16.mxu0 0
      %857 = vmatpush1.bf16.msra.mxu0 %v655
      %858 = vmatprep.subr.bf16.mxu0 0
      %859 = vmatpush1.bf16.msra.mxu0 %v652
      %860 = vmatprep.subr.bf16.mxu0 0
      %861 = vmatpush1.bf16.msra.mxu0 %v649
      %862 = vmatprep.subr.bf16.mxu0 0
      %863 = vmatpush1.bf16.msra.mxu0 %v646
      %864 = vmatprep.subr.bf16.mxu0 0
      %865 = vmatpush1.bf16.msra.mxu0 %v643
      %866 = vmatprep.subr.bf16.mxu0 0
      %867 = vmatpush2.bf16.msra.mxu0 0
      %868 = vmatprep.subr.bf16.mxu0 0
      %869 = vmatpush2.bf16.msra.mxu0 0
      %870 = vmatprep.subr.bf16.mxu0 0
      %871 = vmatpush2.bf16.msra.mxu0 0
      %872 = vmatprep.subr.bf16.mxu0 0
      %873 = vmatpush2.bf16.msra.mxu0 0
      %874 = vmatprep.subr.bf16.mxu0 0
      %875 = vmatpush2.bf16.msra.mxu0 0
      %876 = vmatprep.subr.bf16.mxu0 0
      %877 = vmatpush2.bf16.msra.mxu0 0
      %878 = vmatprep.subr.bf16.mxu0 0
      %879 = vmatpush2.bf16.msra.mxu0 0
      %880 = vmatprep.subr.bf16.mxu0 0
      %881 = vmatpush2.bf16.msra.mxu0 0
      %882 = vmatprep.mubr.bf16.mxu0 0
      %883 = vmatmul.mubr.bf16.gmra.mxu0 %v808
      %v884 = vpop.f32.mrf.mxu0
      %v885 = vadd.f32 0.0, %v884
      %v886 = vpop.f32.mrf.mxu0
      %v887 = vpop.f32.mrf.mxu0
      %v888 = vpop.f32.mrf.mxu0
      %889 = vdwg.mxu0
      %v890 = vadd.f32 %v805, %v844
      %v891 = vxor.u32 %v890, 2147483648
      %v892 = vmul.f32 %v891, 1.442695
      %v893 = vpow.pop %v892
      %v894 = vadd.f32 %v893, 1.0
      %v895 = vrcp.pop %v894
      %v896 = vmul.f32 1.0, %v895
      %v897 = vadd.f32 %v806, %v846
      %v898 = vxor.u32 %v897, 2147483648
      %v899 = vmul.f32 %v898, 1.442695
      %v900 = vpow.pop %v899
      %v901 = vadd.f32 %v900, 1.0
      %v902 = vrcp.pop %v901
      %v903 = vmul.f32 1.0, %v902
      %v904 = vadd.f32 %v885, %v788
      %v905 = vmul.f32 %v896, %v904
      %v906 = vadd.f32 %v807, %v905
      %v907 = vtanh.pop %v906
      %v908 = vsub.f32 1.0, %v903
      %v909 = vmul.f32 %v908, %v907
      %v910 = vmul.f32 %v903, %v797
      %v911 = vadd.f32 %v909, %v910
      %s912 = smul.u32 %s801, 8
      %s913 = scalar_lea.vmem [#allocation4], %s912
      %914 = vst [vmem:[%s913] sm:$0xff] %v911
      %s915 = sadd.s32 %s553, 2
      %s916 = smul.u32 %s915, 3
      %s917 = smul.addr %s916, 8
      %s918 = scalar_lea.vmem [#allocation3], %s917
      %v919 = vld [vmem:[%s918] sm:$0xff]
      %v920 = vld [vmem:[%s918 + $0x8] sm:$0xff]
      %v921 = vld [vmem:[%s918 + $0x10] sm:$0xff]
      %v922 = vpack.c.bf16 %v911, %v911
      %923 = vmatprep.subr.bf16.mxu0 %v663
      %924 = vmatpush1.bf16.msra.mxu0 %v662
      %925 = vmatprep.subr.bf16.mxu0 %v660
      %926 = vmatpush1.bf16.msra.mxu0 %v659
      %927 = vmatprep.subr.bf16.mxu0 %v657
      %928 = vmatpush1.bf16.msra.mxu0 %v656
      %929 = vmatprep.subr.bf16.mxu0 %v654
      %930 = vmatpush1.bf16.msra.mxu0 %v653
      %931 = vmatprep.subr.bf16.mxu0 %v651
      %932 = vmatpush1.bf16.msra.mxu0 %v650
      %933 = vmatprep.subr.bf16.mxu0 %v648
      %934 = vmatpush1.bf16.msra.mxu0 %v647
      %935 = vmatprep.subr.bf16.mxu0 %v645
      %936 = vmatpush1.bf16.msra.mxu0 %v644
      %937 = vmatprep.subr.bf16.mxu0 %v642
      %938 = vmatpush1.bf16.msra.mxu0 %v641
      %939 = vmatprep.subr.bf16.mxu0 0
      %940 = vmatpush2.bf16.msra.mxu0 0
      %941 = vmatprep.subr.bf16.mxu0 0
      %942 = vmatpush2.bf16.msra.mxu0 0
      %943 = vmatprep.subr.bf16.mxu0 0
      %944 = vmatpush2.bf16.msra.mxu0 0
      %945 = vmatprep.subr.bf16.mxu0 0
      %946 = vmatpush2.bf16.msra.mxu0 0
      %947 = vmatprep.subr.bf16.mxu0 0
      %948 = vmatpush2.bf16.msra.mxu0 0
      %949 = vmatprep.subr.bf16.mxu0 0
      %950 = vmatpush2.bf16.msra.mxu0 0
      %951 = vmatprep.subr.bf16.mxu0 0
      %952 = vmatpush2.bf16.msra.mxu0 0
      %953 = vmatprep.subr.bf16.mxu0 0
      %954 = vmatpush2.bf16.msra.mxu0 0
      %955 = vmatprep.mubr.bf16.mxu0 0
      %956 = vmatmul.mubr.bf16.gmra.mxu0 %v922
      %v957 = vpop.f32.mrf.mxu0
      %v958 = vadd.f32 0.0, %v957
      %v959 = vpop.f32.mrf.mxu0
      %v960 = vadd.f32 0.0, %v959
      %v961 = vpop.f32.mrf.mxu0
      %v962 = vpop.f32.mrf.mxu0
      %963 = vdwg.mxu0
      %964 = vmatprep.subr.bf16.mxu0 0
      %965 = vmatpush1.bf16.msra.mxu0 %v664
      %966 = vmatprep.subr.bf16.mxu0 0
      %967 = vmatpush1.bf16.msra.mxu0 %v661
      %968 = vmatprep.subr.bf16.mxu0 0
      %969 = vmatpush1.bf16.msra.mxu0 %v658
      %970 = vmatprep.subr.bf16.mxu0 0
      %971 = vmatpush1.bf16.msra.mxu0 %v655
      %972 = vmatprep.subr.bf16.mxu0 0
      %973 = vmatpush1.bf16.msra.mxu0 %v652
      %974 = vmatprep.subr.bf16.mxu0 0
      %975 = vmatpush1.bf16.msra.mxu0 %v649
      %976 = vmatprep.subr.bf16.mxu0 0
      %977 = vmatpush1.bf16.msra.mxu0 %v646
      %978 = vmatprep.subr.bf16.mxu0 0
      %979 = vmatpush1.bf16.msra.mxu0 %v643
      %980 = vmatprep.subr.bf16.mxu0 0
      %981 = vmatpush2.bf16.msra.mxu0 0
      %982 = vmatprep.subr.bf16.mxu0 0
      %983 = vmatpush2.bf16.msra.mxu0 0
      %984 = vmatprep.subr.bf16.mxu0 0
      %985 = vmatpush2.bf16.msra.mxu0 0
      %986 = vmatprep.subr.bf16.mxu0 0
      %987 = vmatpush2.bf16.msra.mxu0 0
      %988 = vmatprep.subr.bf16.mxu0 0
      %989 = vmatpush2.bf16.msra.mxu0 0
      %990 = vmatprep.subr.bf16.mxu0 0
      %991 = vmatpush2.bf16.msra.mxu0 0
      %992 = vmatprep.subr.bf16.mxu0 0
      %993 = vmatpush2.bf16.msra.mxu0 0
      %994 = vmatprep.subr.bf16.mxu0 0
      %995 = vmatpush2.bf16.msra.mxu0 0
      %996 = vmatprep.mubr.bf16.mxu0 0
      %997 = vmatmul.mubr.bf16.gmra.mxu0 %v922
      %v998 = vpop.f32.mrf.mxu0
      %v999 = vadd.f32 0.0, %v998
      %v1000 = vpop.f32.mrf.mxu0
      %v1001 = vpop.f32.mrf.mxu0
      %v1002 = vpop.f32.mrf.mxu0
      %1003 = vdwg.mxu0
      %v1004 = vadd.f32 %v919, %v958
      %v1005 = vxor.u32 %v1004, 2147483648
      %v1006 = vmul.f32 %v1005, 1.442695
      %v1007 = vpow.pop %v1006
      %v1008 = vadd.f32 %v1007, 1.0
      %v1009 = vrcp.pop %v1008
      %v1010 = vmul.f32 1.0, %v1009
      %v1011 = vadd.f32 %v920, %v960
      %v1012 = vxor.u32 %v1011, 2147483648
      %v1013 = vmul.f32 %v1012, 1.442695
      %v1014 = vpow.pop %v1013
      %v1015 = vadd.f32 %v1014, 1.0
      %v1016 = vrcp.pop %v1015
      %v1017 = vmul.f32 1.0, %v1016
      %v1018 = vadd.f32 %v999, %v788
      %v1019 = vmul.f32 %v1010, %v1018
      %v1020 = vadd.f32 %v921, %v1019
      %v1021 = vtanh.pop %v1020
      %v1022 = vsub.f32 1.0, %v1017
      %v1023 = vmul.f32 %v1022, %v1021
      %v1024 = vmul.f32 %v1017, %v911
      %v1025 = vadd.f32 %v1023, %v1024
      %s1026 = smul.u32 %s915, 8
      %s1027 = scalar_lea.vmem [#allocation4], %s1026
      %1028 = vst [vmem:[%s1027] sm:$0xff] %v1025
      %s1029 = sadd.s32 %s553, 3
      %s1030 = smul.u32 %s1029, 3
      %s1031 = smul.addr %s1030, 8
      %s1032 = scalar_lea.vmem [#allocation3], %s1031
      %v1033 = vld [vmem:[%s1032] sm:$0xff]
      %v1034 = vld [vmem:[%s1032 + $0x8] sm:$0xff]
      %v1035 = vld [vmem:[%s1032 + $0x10] sm:$0xff]
      %v1036 = vpack.c.bf16 %v1025, %v1025
      %1037 = vmatprep.subr.bf16.mxu0 %v663
      %1038 = vmatpush1.bf16.msra.mxu0 %v662
      %1039 = vmatprep.subr.bf16.mxu0 %v660
      %1040 = vmatpush1.bf16.msra.mxu0 %v659
      %1041 = vmatprep.subr.bf16.mxu0 %v657
      %1042 = vmatpush1.bf16.msra.mxu0 %v656
      %1043 = vmatprep.subr.bf16.mxu0 %v654
      %1044 = vmatpush1.bf16.msra.mxu0 %v653
      %1045 = vmatprep.subr.bf16.mxu0 %v651
      %1046 = vmatpush1.bf16.msra.mxu0 %v650
      %1047 = vmatprep.subr.bf16.mxu0 %v648
      %1048 = vmatpush1.bf16.msra.mxu0 %v647
      %1049 = vmatprep.subr.bf16.mxu0 %v645
      %1050 = vmatpush1.bf16.msra.mxu0 %v644
      %1051 = vmatprep.subr.bf16.mxu0 %v642
      %1052 = vmatpush1.bf16.msra.mxu0 %v641
      %1053 = vmatprep.subr.bf16.mxu0 0
      %1054 = vmatpush2.bf16.msra.mxu0 0
      %1055 = vmatprep.subr.bf16.mxu0 0
      %1056 = vmatpush2.bf16.msra.mxu0 0
      %1057 = vmatprep.subr.bf16.mxu0 0
      %1058 = vmatpush2.bf16.msra.mxu0 0
      %1059 = vmatprep.subr.bf16.mxu0 0
      %1060 = vmatpush2.bf16.msra.mxu0 0
      %1061 = vmatprep.subr.bf16.mxu0 0
      %1062 = vmatpush2.bf16.msra.mxu0 0
      %1063 = vmatprep.subr.bf16.mxu0 0
      %1064 = vmatpush2.bf16.msra.mxu0 0
      %1065 = vmatprep.subr.bf16.mxu0 0
      %1066 = vmatpush2.bf16.msra.mxu0 0
      %1067 = vmatprep.subr.bf16.mxu0 0
      %1068 = vmatpush2.bf16.msra.mxu0 0
      %1069 = vmatprep.mubr.bf16.mxu0 0
      %1070 = vmatmul.mubr.bf16.gmra.mxu0 %v1036
      %v1071 = vpop.f32.mrf.mxu0
      %v1072 = vadd.f32 0.0, %v1071
      %v1073 = vpop.f32.mrf.mxu0
      %v1074 = vadd.f32 0.0, %v1073
      %v1075 = vpop.f32.mrf.mxu0
      %v1076 = vpop.f32.mrf.mxu0
      %1077 = vdwg.mxu0
      %1078 = vmatprep.subr.bf16.mxu0 0
      %1079 = vmatpush1.bf16.msra.mxu0 %v664
      %1080 = vmatprep.subr.bf16.mxu0 0
      %1081 = vmatpush1.bf16.msra.mxu0 %v661
      %1082 = vmatprep.subr.bf16.mxu0 0
      %1083 = vmatpush1.bf16.msra.mxu0 %v658
      %1084 = vmatprep.subr.bf16.mxu0 0
      %1085 = vmatpush1.bf16.msra.mxu0 %v655
      %1086 = vmatprep.subr.bf16.mxu0 0
      %1087 = vmatpush1.bf16.msra.mxu0 %v652
      %1088 = vmatprep.subr.bf16.mxu0 0
      %1089 = vmatpush1.bf16.msra.mxu0 %v649
      %1090 = vmatprep.subr.bf16.mxu0 0
      %1091 = vmatpush1.bf16.msra.mxu0 %v646
      %1092 = vmatprep.subr.bf16.mxu0 0
      %1093 = vmatpush1.bf16.msra.mxu0 %v643
      %1094 = vmatprep.subr.bf16.mxu0 0
      %1095 = vmatpush2.bf16.msra.mxu0 0
      %1096 = vmatprep.subr.bf16.mxu0 0
      %1097 = vmatpush2.bf16.msra.mxu0 0
      %1098 = vmatprep.subr.bf16.mxu0 0
      %1099 = vmatpush2.bf16.msra.mxu0 0
      %1100 = vmatprep.subr.bf16.mxu0 0
      %1101 = vmatpush2.bf16.msra.mxu0 0
      %1102 = vmatprep.subr.bf16.mxu0 0
      %1103 = vmatpush2.bf16.msra.mxu0 0
      %1104 = vmatprep.subr.bf16.mxu0 0
      %1105 = vmatpush2.bf16.msra.mxu0 0
      %1106 = vmatprep.subr.bf16.mxu0 0
      %1107 = vmatpush2.bf16.msra.mxu0 0
      %1108 = vmatprep.subr.bf16.mxu0 0
      %1109 = vmatpush2.bf16.msra.mxu0 0
      %1110 = vmatprep.mubr.bf16.mxu0 0
      %1111 = vmatmul.mubr.bf16.gmra.mxu0 %v1036
      %v1112 = vpop.f32.mrf.mxu0
      %v1113 = vadd.f32 0.0, %v1112
      %v1114 = vpop.f32.mrf.mxu0
      %v1115 = vpop.f32.mrf.mxu0
      %v1116 = vpop.f32.mrf.mxu0
      %1117 = vdwg.mxu0
      %v1118 = vadd.f32 %v1033, %v1072
      %v1119 = vxor.u32 %v1118, 2147483648
      %v1120 = vmul.f32 %v1119, 1.442695
      %v1121 = vpow.pop %v1120
      %v1122 = vadd.f32 %v1121, 1.0
      %v1123 = vrcp.pop %v1122
      %v1124 = vmul.f32 1.0, %v1123
      %v1125 = vadd.f32 %v1034, %v1074
      %v1126 = vxor.u32 %v1125, 2147483648
      %v1127 = vmul.f32 %v1126, 1.442695
      %v1128 = vpow.pop %v1127
      %v1129 = vadd.f32 %v1128, 1.0
      %v1130 = vrcp.pop %v1129
      %v1131 = vmul.f32 1.0, %v1130
      %v1132 = vadd.f32 %v1113, %v788
      %v1133 = vmul.f32 %v1124, %v1132
      %v1134 = vadd.f32 %v1035, %v1133
      %v1135 = vtanh.pop %v1134
      %v1136 = vsub.f32 1.0, %v1131
      %v1137 = vmul.f32 %v1136, %v1135
      %v1138 = vmul.f32 %v1131, %v1025
      %v1139 = vadd.f32 %v1137, %v1138
      %s1140 = smul.u32 %s1029, 8
      %s1141 = scalar_lea.vmem [#allocation4], %s1140
      %1142 = vst [vmem:[%s1141] sm:$0xff] %v1139
    $region43: #{tpu_custom_call.1} parent=1 // loop_footer
      %s420 = sadd.s32 1, %s416
    $region44: #{tpu_custom_call.1} parent=1 // loop_footer_branch
      %415 = sbr.rel target = $region40
    $region45: #{tpu_custom_call.1} parent=1 // loop_exit
      _
    %1143 = vst [vmem:[#allocation11] sm:$0xff] %v421
    $region50: #{tpu_custom_call.1} parent=1
      #allocation17 [shape = 's32[1]{0}', space=sflag, size = 0x4, scoped, tag = 'scoped memory for tpu_custom_call.1']
      // Predicated region
      $region51: #{tpu_custom_call.1} parent=50 // pred_check
        _
      $region52: #{tpu_custom_call.1} parent=50 // pred_check_branch
        %1145 = sbr.rel target = $region54
      $region53: #{tpu_custom_call.1} parent=50 // pred_region
        %1146 = sst [smem:[#allocation15]] [#allocation19]
        %1147 = sst [smem:[#allocation16]] [#allocation18]
      $region54: #{tpu_custom_call.1} parent=50 // pred_fallthru
        _
      %1149 = shalt.err (0)
      %s1151 = sshll.u32 [#allocation4], 4
      %s1152 = int_to_ptr.vmem [resolvable:$true] %s1151
      %1154 = dma.vmem_to_hbm [thread:$0]  %s1152, 1024, %s6, [#allocation17]
      %s1155 = smul.u32 8, 8
      %s1156 = smul.u32 %s1155, 1
      %s1157 = sshll.u32 %s1156, 4
      %1158 = dma.done [#allocation17], %s1157
    // Predicated region
    $region55: #{tpu_custom_call.1} parent=1 // pred_check
      _
    $region56: #{tpu_custom_call.1} parent=1 // pred_check_branch
      %1160 = sbr.rel (0) target = $region58
    $region57: #{tpu_custom_call.1} parent=1 // pred_region
      %s1162 = ssub.s32 128, 128
      %1163 = vsyncadd [#allocation7], %s1162
      %s1165 = sshll.u32 [#allocation11], 4
      %s1166 = int_to_ptr.vmem [resolvable:$true] %s1165
      %1168 = dma.vmem_to_hbm [thread:$0]  %s1166, 128, %s7, [#allocation7]
    $region58: #{tpu_custom_call.1} parent=1 // pred_fallthru
      _
    // Predicated region
    $region59: #{tpu_custom_call.1} parent=1 // pred_check
      _
    $region60: #{tpu_custom_call.1} parent=1 // pred_check_branch
      %1170 = sbr.rel (0) target = $region62
    $region61: #{tpu_custom_call.1} parent=1 // pred_region
      %1171 = dma.done [#allocation7], 128
    $region62: #{tpu_custom_call.1} parent=1 // pred_fallthru
      _
    %1172 = vsyncpa [#allocation6], 1
    %1173 = vsyncpa [#allocation9], 1
    %1174 = vsyncpa [#allocation7], 1

</llo_original>
